<compile_context>
chip_gen: v6e
topology: v6e:2x2x1
jax: 0.10.0
libtpu: 0.0.40
codegen_flags: <defaults>
</compile_context>

<pallas_src>
import functools

import numpy as np

import jax
import jax.numpy as jnp
from jax.experimental import pallas as pl
from jax.experimental.pallas import tpu as pltpu


LEAKY_SLOPE = 0.2
LANE = 128


def _out_size(h):
    # PyTorch Conv2d(k=3, s=2, p=1): floor((h + 2 - 3)/2) + 1
    return (h - 1) // 2 + 1


def _round_up_lanes(n):
    return max(LANE, ((n + LANE - 1) // LANE) * LANE)


# ----------------------------------------------------------------------------
# One-time parameter preprocessing: exact dense-matmul equivalent of the conv
# ----------------------------------------------------------------------------
def _conv3x3s2_as_dense(w_hwio, b, H, W, input_layout):
    """Exact dense equivalent of Conv2d(k=3, s=2, p=1) at fixed (H, W).

    Returns:
      W_dense : (H*W*Cin, Ho*Wo*Cout) so that out_flat = in_flat @ W_dense + b_d
      b_dense : (1, Ho*Wo*Cout)
      (Ho, Wo, Cout)

    `input_layout` selects how the layer input is flattened:
      "nchw": q = (c*H + h)*W + w   (raw network input, reshaped directly)
      "nhwc": q = (h*W + w)*Cin + c (chained activations; output flat order is
                                     always (ho, wo, cout))
    Padding taps are simply absent (they never contribute); the untouched rows
    of W_dense are structural zeros that the MXU multiplies but that cannot
    change the result.
    """
    KH, KW, Cin, Cout = w_hwio.shape
    assert (KH, KW) == (3, 3)
    Ho, Wo = _out_size(H), _out_size(W)
    Wd = np.zeros((H * W * Cin, Ho * Wo * Cout), np.float32)
    for ho in range(Ho):
        for wo in range(Wo):
            p = ho * Wo + wo
            for kh in range(3):
                hi = 2 * ho + kh - 1
                if hi < 0 or hi >= H:
                    continue
                for kw in range(3):
                    wi = 2 * wo + kw - 1
                    if wi < 0 or wi >= W:
                        continue
                    for c in range(Cin):
                        if input_layout == "nhwc":
                            q = (hi * W + wi) * Cin + c
                        else:  # "nchw"
                            q = (c * H + hi) * W + wi
                        Wd[q, p * Cout:(p + 1) * Cout] = w_hwio[kh, kw, c, :]
    bd = np.tile(np.asarray(b, np.float32), Ho * Wo).reshape(1, Ho * Wo * Cout)
    return Wd, bd, (Ho, Wo, Cout)


# ----------------------------------------------------------------------------
# Fused Pallas kernel: 7 x (matmul + bias [+ LeakyReLU]) entirely in VMEM
# ----------------------------------------------------------------------------
def _fused_encoder_kernel(*refs, num_layers, slope, mxu_dtype):
    # refs = (x, w0, b0, w1, b1, ..., w6, b6, out)
    x_ref, o_ref = refs[0], refs[-1]
    act = x_ref[...].astype(jnp.float32)
    for i in range(num_layers):
        w = refs[1 + 2 * i][...]                       # already mxu_dtype
        b = refs[2 + 2 * i][...].astype(jnp.float32)   # bias add in f32
        z = jnp.dot(act.astype(mxu_dtype), w.astype(mxu_dtype),
                    preferred_element_type=jnp.float32) + b
        if i < num_layers - 1:
            z = jnp.where(z > 0.0, z, slope * z)       # LeakyReLU(0.2), f32 VPU
        act = z
    o_ref[...] = act.astype(o_ref.dtype)               # lane-dense unmasked vst


def _pick_batch_tile(n):
    """Largest row tile that gives at least 2 grid steps; else one block."""
    for t in (256, 128, 64, 32, 16, 8):
        if n % t == 0 and n // t >= 2:
            return t
    return n


# ----------------------------------------------------------------------------
# Builder: precompute dense-equivalent weights, return fused forward fn
# ----------------------------------------------------------------------------
def build_encoder(params_hwio, input_chw, latent_dimension,
                  mxu_dtype=jnp.bfloat16):
    """params_hwio: list of (w (3,3,Cin,Cout), b (Cout,)) f32 arrays.

    mxu_dtype=jnp.bfloat16 (default) halves weight DMA and uses single-pass
    MXU issue; accumulation is always f32.  Pass jnp.float32 for bit-close
    agreement with an f32 reference conv.
    """
    C, H, W = input_chw
    dense_w, dense_b = [], []
    layout, h, w_sp = "nchw", H, W
    ho = wo = cout = None
    for (wk, bk) in params_hwio:
        wk_np = np.asarray(jax.device_get(wk), np.float32)
        bk_np = np.asarray(jax.device_get(bk), np.float32)
        Wd, bd, (ho, wo, cout) = _conv3x3s2_as_dense(wk_np, bk_np, h, w_sp, layout)
        dense_w.append(Wd)
        dense_b.append(bd)
        layout, h, w_sp = "nhwc", ho, wo
    assert h == 1 and w_sp == 1, "Encoder expects spatial to reduce to 1x1"
    assert cout == 2 * latent_dimension
    num_layers = len(dense_w)

    # Lane-pad every layer's output width to a multiple of 128 (min 128) and
    # zero-pad the next layer's weight rows to match.  Exact: padded columns
    # get weight 0 + bias 0 -> activation 0 (LeakyReLU(0)=0) -> multiplied by
    # zero rows.  Keeps every activation / matmul operand and the final HBM
    # store full-(8,128)-tile (no masked VPU ops, full MXU column feed).
    for i in range(num_layers):
        cols = dense_w[i].shape[1]
        pc = _round_up_lanes(cols)
        if pc != cols:
            Wp = np.zeros((dense_w[i].shape[0], pc), np.float32)
            Wp[:, :cols] = dense_w[i]
            bp = np.zeros((1, pc), np.float32)
            bp[:, :cols] = dense_b[i]
            dense_w[i], dense_b[i] = Wp, bp
            if i + 1 < num_layers:
                nxt = dense_w[i + 1]
                Wn = np.zeros((pc, nxt.shape[1]), np.float32)
                Wn[:nxt.shape[0], :] = nxt
                dense_w[i + 1] = Wn

    padded_out = dense_w[-1].shape[1]

    # VMEM budget guard (v7x has only 64 MiB physical / 32 MiB scoped default).
    weight_bytes = sum(wd.size for wd in dense_w) * jnp.dtype(mxu_dtype).itemsize
    if weight_bytes > 24 * 1024 * 1024:
        # TODO(synk): tiled im2col path for layers 0-2 at large spatial sizes.
        raise NotImplementedError(
            "dense-equivalent weights (%d bytes) exceed the safe VMEM budget; "
            "input spatial size too large for the fused dense rewrite" % weight_bytes)

    w_dev = [jnp.asarray(Wd, dtype=mxu_dtype) for Wd in dense_w]    # MXU operands
    b_dev = [jnp.asarray(bd, dtype=jnp.float32) for bd in dense_b]  # f32 bias add
    in_flat_dim = C * H * W

    def forward(x_nchw):
        """Fused encoder forward.  For best throughput pack requests to at
        least N=8 rows (f32) / N=16 rows (bf16) per call: the hardware
        processes a full sublane / MXU tile regardless, so extra rows up to
        the tile are free."""
        N = x_nchw.shape[0]
        x_flat = x_nchw.reshape(N, in_flat_dim).astype(jnp.float32)
        operands = [x_flat]
        for Wd, bd in zip(w_dev, b_dev):
            operands.extend((Wd, bd))

        tile_n = _pick_batch_tile(N)
        grid = (N // tile_n,)

        # Activation row-tile moves per grid step; weights/biases use a
        # constant index_map so they stay VMEM-resident across the grid.
        in_specs = [pl.BlockSpec((tile_n, in_flat_dim), lambda i: (i, 0))]
        for Wd, bd in zip(w_dev, b_dev):
            in_specs.append(pl.BlockSpec(Wd.shape, lambda i: (0, 0)))
            in_specs.append(pl.BlockSpec(bd.shape, lambda i: (0, 0)))
        out_spec = pl.BlockSpec((tile_n, padded_out), lambda i: (i, 0))

        # What the kernel actually executes (dense matmuls incl. structural
        # zeros) -- advisory scheduling hint only.
        flops = sum(2 * N * Wd.shape[0] * Wd.shape[1] for Wd in w_dev)
        bytes_accessed = (sum(int(o.size) * o.dtype.itemsize for o in operands)
                          + N * padded_out * 4)

        out = pl.pallas_call(
            functools.partial(_fused_encoder_kernel, num_layers=num_layers,
                              slope=LEAKY_SLOPE, mxu_dtype=mxu_dtype),
            out_shape=jax.ShapeDtypeStruct((N, padded_out), jnp.float32),
            grid=grid,
            in_specs=in_specs,
            out_specs=out_spec,
            compiler_params=pltpu.CompilerParams(
                dimension_semantics=("parallel",)),
            cost_estimate=pl.CostEstimate(flops=flops, transcendentals=0,
                                          bytes_accessed=bytes_accessed),
        )(*operands)

        flat = out[:, :2 * latent_dimension]
        return flat[:, :latent_dimension], flat[:, latent_dimension:]

    return forward


# ----------------------------------------------------------------------------
# Deterministic synthetic parameters (HWIO conv weights, like the PyTorch module)
# ----------------------------------------------------------------------------
def init_encoder_params(key, input_channels, latent_dimension):
    channels = [input_channels, 8, 16, 32, 64, 128, 256, 2 * latent_dimension]
    params = []
    for i in range(len(channels) - 1):
        key, kw, kb = jax.random.split(key, 3)
        cin, cout = channels[i], channels[i + 1]
        fan_in = 9 * cin
        w = jax.random.normal(kw, (3, 3, cin, cout), jnp.float32) / jnp.sqrt(fan_in)
        b = jax.random.normal(kb, (cout,), jnp.float32) * 0.01
        params.append((w, b))
    return params


# ----------------------------------------------------------------------------
if __name__ == "__main__":
    INPUT_CHANNELS = 3
    LATENT_DIM = 8
    SPATIAL = 16  # 16 -> 8 -> 4 -> 2 -> 1 -> 1 -> 1 -> 1

    key = jax.random.PRNGKey(0)
    key, kx, kx_big = jax.random.split(key, 3)
    params = init_encoder_params(key, INPUT_CHANNELS, LATENT_DIM)

    # Reference: plain XLA conv chain (mirrors the PyTorch forward exactly).
    def reference(x_nchw):
        ref = x_nchw
        for i, (w, b) in enumerate(params):
            ref = jax.lax.conv_general_dilated(
                ref, w, window_strides=(2, 2), padding=((1, 1), (1, 1)),
                dimension_numbers=("NCHW", "HWIO", "NCHW"),
                precision=jax.lax.Precision.HIGHEST)
            ref = ref + b.reshape(1, -1, 1, 1)
            if i < len(params) - 1:
                ref = jnp.where(ref > 0, ref, LEAKY_SLOPE * ref)
        flat = ref.reshape(x_nchw.shape[0], 2 * LATENT_DIM)
        return flat[:, :LATENT_DIM], flat[:, LATENT_DIM:]

    x = jax.random.normal(kx, (2, INPUT_CHANNELS, SPATIAL, SPATIAL), jnp.float32)

    # --- 1) default bf16 MXU path, small batch (grid=(1,)) --------------------
    encoder_bf16 = build_encoder(params, (INPUT_CHANNELS, SPATIAL, SPATIAL),
                                 LATENT_DIM)                       # bf16 default
    mu, logvar = encoder_bf16(x)
    mu = jax.block_until_ready(mu)
    logvar = jax.block_until_ready(logvar)

    mu_ref, logvar_ref = reference(x)
    assert mu.shape == (2, LATENT_DIM), mu.shape
    assert logvar.shape == (2, LATENT_DIM), logvar.shape
    assert jnp.all(jnp.isfinite(mu)) and jnp.all(jnp.isfinite(logvar))
    np.testing.assert_allclose(np.asarray(mu), np.asarray(mu_ref),
                               rtol=2e-2, atol=2e-2)
    np.testing.assert_allclose(np.asarray(logvar), np.asarray(logvar_ref),
                               rtol=2e-2, atol=2e-2)

    # --- 2) f32 MXU path: much tighter tolerance (review correctness item) ----
    encoder_f32 = build_encoder(params, (INPUT_CHANNELS, SPATIAL, SPATIAL),
                                LATENT_DIM, mxu_dtype=jnp.float32)
    mu32, logvar32 = encoder_f32(x)
    mu32 = jax.block_until_ready(mu32)
    np.testing.assert_allclose(np.asarray(mu32), np.asarray(mu_ref),
                               rtol=1e-3, atol=1e-5)
    np.testing.assert_allclose(np.asarray(logvar32), np.asarray(logvar_ref),
                               rtol=1e-3, atol=1e-5)

    # --- 3) larger batch exercises the parallel batch grid (grid=(2,)) --------
    x_big = jax.random.normal(kx_big, (16, INPUT_CHANNELS, SPATIAL, SPATIAL),
                              jnp.float32)
    mu_b, logvar_b = encoder_bf16(x_big)
    mu_b = jax.block_until_ready(mu_b)
    mu_bref, logvar_bref = reference(x_big)
    np.testing.assert_allclose(np.asarray(mu_b), np.asarray(mu_bref),
                               rtol=2e-2, atol=2e-2)
    np.testing.assert_allclose(np.asarray(logvar_b), np.asarray(logvar_bref),
                               rtol=2e-2, atol=2e-2)

    print("KERNEL_OK")
</pallas_src>

<mosaic_0001>
module attributes {stable_mosaic.version = 11 : i64} {
  func.func @_fused_encoder_kernel(%arg0: i32, %arg1: memref<2x768xf32, #tpu.memory_space<vmem>>, %arg2: memref<768x512xbf16, #tpu.memory_space<vmem>>, %arg3: memref<1x512xf32, #tpu.memory_space<vmem>>, %arg4: memref<512x256xbf16, #tpu.memory_space<vmem>>, %arg5: memref<1x256xf32, #tpu.memory_space<vmem>>, %arg6: memref<256x128xbf16, #tpu.memory_space<vmem>>, %arg7: memref<1x128xf32, #tpu.memory_space<vmem>>, %arg8: memref<128x128xbf16, #tpu.memory_space<vmem>>, %arg9: memref<1x128xf32, #tpu.memory_space<vmem>>, %arg10: memref<128x128xbf16, #tpu.memory_space<vmem>>, %arg11: memref<1x128xf32, #tpu.memory_space<vmem>>, %arg12: memref<128x256xbf16, #tpu.memory_space<vmem>>, %arg13: memref<1x256xf32, #tpu.memory_space<vmem>>, %arg14: memref<256x128xbf16, #tpu.memory_space<vmem>>, %arg15: memref<1x128xf32, #tpu.memory_space<vmem>>, %arg16: memref<2x128xf32, #tpu.memory_space<vmem>>) attributes {dimension_semantics = [#tpu.dimension_semantics<parallel>], iteration_bounds = array<i64: 1>, scalar_prefetch = 0 : i64, scratch_operands = 0 : i64, tpu.core_type = #tpu.core_type<tc>, window_params = [{transform_indices = @transform_0, window_bounds = array<i64: 2, 768>}, {pipeline_mode = #tpu.pipeline_mode<synchronous>, transform_indices = @transform_1, window_bounds = array<i64: 768, 512>}, {pipeline_mode = #tpu.pipeline_mode<synchronous>, transform_indices = @transform_2, window_bounds = array<i64: 1, 512>}, {pipeline_mode = #tpu.pipeline_mode<synchronous>, transform_indices = @transform_3, window_bounds = array<i64: 512, 256>}, {pipeline_mode = #tpu.pipeline_mode<synchronous>, transform_indices = @transform_4, window_bounds = array<i64: 1, 256>}, {pipeline_mode = #tpu.pipeline_mode<synchronous>, transform_indices = @transform_5, window_bounds = array<i64: 256, 128>}, {pipeline_mode = #tpu.pipeline_mode<synchronous>, transform_indices = @transform_6, window_bounds = array<i64: 1, 128>}, {pipeline_mode = #tpu.pipeline_mode<synchronous>, transform_indices = @transform_7, window_bounds = array<i64: 128, 128>}, {pipeline_mode = #tpu.pipeline_mode<synchronous>, transform_indices = @transform_8, window_bounds = array<i64: 1, 128>}, {pipeline_mode = #tpu.pipeline_mode<synchronous>, transform_indices = @transform_9, window_bounds = array<i64: 128, 128>}, {pipeline_mode = #tpu.pipeline_mode<synchronous>, transform_indices = @transform_10, window_bounds = array<i64: 1, 128>}, {pipeline_mode = #tpu.pipeline_mode<synchronous>, transform_indices = @transform_11, window_bounds = array<i64: 128, 256>}, {pipeline_mode = #tpu.pipeline_mode<synchronous>, transform_indices = @transform_12, window_bounds = array<i64: 1, 256>}, {pipeline_mode = #tpu.pipeline_mode<synchronous>, transform_indices = @transform_13, window_bounds = array<i64: 256, 128>}, {pipeline_mode = #tpu.pipeline_mode<synchronous>, transform_indices = @transform_14, window_bounds = array<i64: 1, 128>}, {transform_indices = @transform_15, window_bounds = array<i64: 2, 128>}]} {
    %c0 = arith.constant 0 : index
    %c0_0 = arith.constant 0 : index
    %0 = vector.load %arg1[%c0, %c0_0] : memref<2x768xf32, #tpu.memory_space<vmem>>, vector<2x768xf32>
    %c0_1 = arith.constant 0 : index
    %c0_2 = arith.constant 0 : index
    %1 = vector.load %arg2[%c0_1, %c0_2] : memref<768x512xbf16, #tpu.memory_space<vmem>>, vector<768x512xbf16>
    %c0_3 = arith.constant 0 : index
    %c0_4 = arith.constant 0 : index
    %2 = vector.load %arg3[%c0_3, %c0_4] : memref<1x512xf32, #tpu.memory_space<vmem>>, vector<1x512xf32>
    %3 = arith.truncf %0 : vector<2x768xf32> to vector<2x768xbf16>
    %cst = arith.constant dense<0.000000e+00> : vector<2x512xf32>
    %4 = tpu.matmul %3, %1, %cst {dimension_numbers = #tpu.dot_dimension_numbers<[1], [0], [0], [1], [0, 0, 1, 1], [], []>} : vector<2x768xbf16>, vector<768x512xbf16>, vector<2x512xf32> -> vector<2x512xf32>
    %5 = vector.broadcast %2 : vector<1x512xf32> to vector<2x512xf32>
    %6 = arith.addf %4, %5 : vector<2x512xf32>
    %cst_5 = arith.constant 0.000000e+00 : f32
    %7 = vector.broadcast %cst_5 : f32 to vector<2x512xf32>
    %8 = arith.cmpf ogt, %6, %7 : vector<2x512xf32>
    %cst_6 = arith.constant 2.000000e-01 : f32
    %9 = vector.broadcast %cst_6 : f32 to vector<2x512xf32>
    %10 = arith.mulf %9, %6 : vector<2x512xf32>
    %11 = arith.select %8, %6, %10 : vector<2x512xi1>, vector<2x512xf32>
    %c0_7 = arith.constant 0 : index
    %c0_8 = arith.constant 0 : index
    %12 = vector.load %arg4[%c0_7, %c0_8] : memref<512x256xbf16, #tpu.memory_space<vmem>>, vector<512x256xbf16>
    %c0_9 = arith.constant 0 : index
    %c0_10 = arith.constant 0 : index
    %13 = vector.load %arg5[%c0_9, %c0_10] : memref<1x256xf32, #tpu.memory_space<vmem>>, vector<1x256xf32>
    %14 = arith.truncf %11 : vector<2x512xf32> to vector<2x512xbf16>
    %cst_11 = arith.constant dense<0.000000e+00> : vector<2x256xf32>
    %15 = tpu.matmul %14, %12, %cst_11 {dimension_numbers = #tpu.dot_dimension_numbers<[1], [0], [0], [1], [0, 0, 1, 1], [], []>} : vector<2x512xbf16>, vector<512x256xbf16>, vector<2x256xf32> -> vector<2x256xf32>
    %16 = vector.broadcast %13 : vector<1x256xf32> to vector<2x256xf32>
    %17 = arith.addf %15, %16 : vector<2x256xf32>
    %cst_12 = arith.constant 0.000000e+00 : f32
    %18 = vector.broadcast %cst_12 : f32 to vector<2x256xf32>
    %19 = arith.cmpf ogt, %17, %18 : vector<2x256xf32>
    %cst_13 = arith.constant 2.000000e-01 : f32
    %20 = vector.broadcast %cst_13 : f32 to vector<2x256xf32>
    %21 = arith.mulf %20, %17 : vector<2x256xf32>
    %22 = arith.select %19, %17, %21 : vector<2x256xi1>, vector<2x256xf32>
    %c0_14 = arith.constant 0 : index
    %c0_15 = arith.constant 0 : index
    %23 = vector.load %arg6[%c0_14, %c0_15] : memref<256x128xbf16, #tpu.memory_space<vmem>>, vector<256x128xbf16>
    %c0_16 = arith.constant 0 : index
    %c0_17 = arith.constant 0 : index
    %24 = vector.load %arg7[%c0_16, %c0_17] : memref<1x128xf32, #tpu.memory_space<vmem>>, vector<1x128xf32>
    %25 = arith.truncf %22 : vector<2x256xf32> to vector<2x256xbf16>
    %cst_18 = arith.constant dense<0.000000e+00> : vector<2x128xf32>
    %26 = tpu.matmul %25, %23, %cst_18 {dimension_numbers = #tpu.dot_dimension_numbers<[1], [0], [0], [1], [0, 0, 1, 1], [], []>} : vector<2x256xbf16>, vector<256x128xbf16>, vector<2x128xf32> -> vector<2x128xf32>
    %27 = vector.broadcast %24 : vector<1x128xf32> to vector<2x128xf32>
    %28 = arith.addf %26, %27 : vector<2x128xf32>
    %cst_19 = arith.constant 0.000000e+00 : f32
    %29 = vector.broadcast %cst_19 : f32 to vector<2x128xf32>
    %30 = arith.cmpf ogt, %28, %29 : vector<2x128xf32>
    %cst_20 = arith.constant 2.000000e-01 : f32
    %31 = vector.broadcast %cst_20 : f32 to vector<2x128xf32>
    %32 = arith.mulf %31, %28 : vector<2x128xf32>
    %33 = arith.select %30, %28, %32 : vector<2x128xi1>, vector<2x128xf32>
    %c0_21 = arith.constant 0 : index
    %c0_22 = arith.constant 0 : index
    %34 = vector.load %arg8[%c0_21, %c0_22] : memref<128x128xbf16, #tpu.memory_space<vmem>>, vector<128x128xbf16>
    %c0_23 = arith.constant 0 : index
    %c0_24 = arith.constant 0 : index
    %35 = vector.load %arg9[%c0_23, %c0_24] : memref<1x128xf32, #tpu.memory_space<vmem>>, vector<1x128xf32>
    %36 = arith.truncf %33 : vector<2x128xf32> to vector<2x128xbf16>
    %cst_25 = arith.constant dense<0.000000e+00> : vector<2x128xf32>
    %37 = tpu.matmul %36, %34, %cst_25 {dimension_numbers = #tpu.dot_dimension_numbers<[1], [0], [0], [1], [0, 0, 1, 1], [], []>} : vector<2x128xbf16>, vector<128x128xbf16>, vector<2x128xf32> -> vector<2x128xf32>
    %38 = vector.broadcast %35 : vector<1x128xf32> to vector<2x128xf32>
    %39 = arith.addf %37, %38 : vector<2x128xf32>
    %cst_26 = arith.constant 0.000000e+00 : f32
    %40 = vector.broadcast %cst_26 : f32 to vector<2x128xf32>
    %41 = arith.cmpf ogt, %39, %40 : vector<2x128xf32>
    %cst_27 = arith.constant 2.000000e-01 : f32
    %42 = vector.broadcast %cst_27 : f32 to vector<2x128xf32>
    %43 = arith.mulf %42, %39 : vector<2x128xf32>
    %44 = arith.select %41, %39, %43 : vector<2x128xi1>, vector<2x128xf32>
    %c0_28 = arith.constant 0 : index
    %c0_29 = arith.constant 0 : index
    %45 = vector.load %arg10[%c0_28, %c0_29] : memref<128x128xbf16, #tpu.memory_space<vmem>>, vector<128x128xbf16>
    %c0_30 = arith.constant 0 : index
    %c0_31 = arith.constant 0 : index
    %46 = vector.load %arg11[%c0_30, %c0_31] : memref<1x128xf32, #tpu.memory_space<vmem>>, vector<1x128xf32>
    %47 = arith.truncf %44 : vector<2x128xf32> to vector<2x128xbf16>
    %cst_32 = arith.constant dense<0.000000e+00> : vector<2x128xf32>
    %48 = tpu.matmul %47, %45, %cst_32 {dimension_numbers = #tpu.dot_dimension_numbers<[1], [0], [0], [1], [0, 0, 1, 1], [], []>} : vector<2x128xbf16>, vector<128x128xbf16>, vector<2x128xf32> -> vector<2x128xf32>
    %49 = vector.broadcast %46 : vector<1x128xf32> to vector<2x128xf32>
    %50 = arith.addf %48, %49 : vector<2x128xf32>
    %cst_33 = arith.constant 0.000000e+00 : f32
    %51 = vector.broadcast %cst_33 : f32 to vector<2x128xf32>
    %52 = arith.cmpf ogt, %50, %51 : vector<2x128xf32>
    %cst_34 = arith.constant 2.000000e-01 : f32
    %53 = vector.broadcast %cst_34 : f32 to vector<2x128xf32>
    %54 = arith.mulf %53, %50 : vector<2x128xf32>
    %55 = arith.select %52, %50, %54 : vector<2x128xi1>, vector<2x128xf32>
    %c0_35 = arith.constant 0 : index
    %c0_36 = arith.constant 0 : index
    %56 = vector.load %arg12[%c0_35, %c0_36] : memref<128x256xbf16, #tpu.memory_space<vmem>>, vector<128x256xbf16>
    %c0_37 = arith.constant 0 : index
    %c0_38 = arith.constant 0 : index
    %57 = vector.load %arg13[%c0_37, %c0_38] : memref<1x256xf32, #tpu.memory_space<vmem>>, vector<1x256xf32>
    %58 = arith.truncf %55 : vector<2x128xf32> to vector<2x128xbf16>
    %cst_39 = arith.constant dense<0.000000e+00> : vector<2x256xf32>
    %59 = tpu.matmul %58, %56, %cst_39 {dimension_numbers = #tpu.dot_dimension_numbers<[1], [0], [0], [1], [0, 0, 1, 1], [], []>} : vector<2x128xbf16>, vector<128x256xbf16>, vector<2x256xf32> -> vector<2x256xf32>
    %60 = vector.broadcast %57 : vector<1x256xf32> to vector<2x256xf32>
    %61 = arith.addf %59, %60 : vector<2x256xf32>
    %cst_40 = arith.constant 0.000000e+00 : f32
    %62 = vector.broadcast %cst_40 : f32 to vector<2x256xf32>
    %63 = arith.cmpf ogt, %61, %62 : vector<2x256xf32>
    %cst_41 = arith.constant 2.000000e-01 : f32
    %64 = vector.broadcast %cst_41 : f32 to vector<2x256xf32>
    %65 = arith.mulf %64, %61 : vector<2x256xf32>
    %66 = arith.select %63, %61, %65 : vector<2x256xi1>, vector<2x256xf32>
    %c0_42 = arith.constant 0 : index
    %c0_43 = arith.constant 0 : index
    %67 = vector.load %arg14[%c0_42, %c0_43] : memref<256x128xbf16, #tpu.memory_space<vmem>>, vector<256x128xbf16>
    %c0_44 = arith.constant 0 : index
    %c0_45 = arith.constant 0 : index
    %68 = vector.load %arg15[%c0_44, %c0_45] : memref<1x128xf32, #tpu.memory_space<vmem>>, vector<1x128xf32>
    %69 = arith.truncf %66 : vector<2x256xf32> to vector<2x256xbf16>
    %cst_46 = arith.constant dense<0.000000e+00> : vector<2x128xf32>
    %70 = tpu.matmul %69, %67, %cst_46 {dimension_numbers = #tpu.dot_dimension_numbers<[1], [0], [0], [1], [0, 0, 1, 1], [], []>} : vector<2x256xbf16>, vector<256x128xbf16>, vector<2x128xf32> -> vector<2x128xf32>
    %71 = vector.broadcast %68 : vector<1x128xf32> to vector<2x128xf32>
    %72 = arith.addf %70, %71 : vector<2x128xf32>
    %c0_47 = arith.constant 0 : index
    %c0_48 = arith.constant 0 : index
    %73 = vector.load %arg16[%c0_47, %c0_48] : memref<2x128xf32, #tpu.memory_space<vmem>>, vector<2x128xf32>
    tpu.vector_store %arg16[%c0_47, %c0_48], %72 {strides = array<i32>} : memref<2x128xf32, #tpu.memory_space<vmem>>, vector<2x128xf32>,
    return
  }
  func.func @transform_0(%arg0: i32) -> (i32, i32) {
    %c0_i32 = arith.constant 0 : i32
    %c0_i32_0 = arith.constant 0 : i32
    return %arg0, %c0_i32 : i32, i32
  }
  func.func @transform_1(%arg0: i32) -> (i32, i32) {
    %c0_i32 = arith.constant 0 : i32
    %c0_i32_0 = arith.constant 0 : i32
    %c0_i32_1 = arith.constant 0 : i32
    return %c0_i32, %c0_i32_0 : i32, i32
  }
  func.func @transform_2(%arg0: i32) -> (i32, i32) {
    %c0_i32 = arith.constant 0 : i32
    %c0_i32_0 = arith.constant 0 : i32
    %c0_i32_1 = arith.constant 0 : i32
    return %c0_i32, %c0_i32_0 : i32, i32
  }
  func.func @transform_3(%arg0: i32) -> (i32, i32) {
    %c0_i32 = arith.constant 0 : i32
    %c0_i32_0 = arith.constant 0 : i32
    %c0_i32_1 = arith.constant 0 : i32
    return %c0_i32, %c0_i32_0 : i32, i32
  }
  func.func @transform_4(%arg0: i32) -> (i32, i32) {
    %c0_i32 = arith.constant 0 : i32
    %c0_i32_0 = arith.constant 0 : i32
    %c0_i32_1 = arith.constant 0 : i32
    return %c0_i32, %c0_i32_0 : i32, i32
  }
  func.func @transform_5(%arg0: i32) -> (i32, i32) {
    %c0_i32 = arith.constant 0 : i32
    %c0_i32_0 = arith.constant 0 : i32
    %c0_i32_1 = arith.constant 0 : i32
    return %c0_i32, %c0_i32_0 : i32, i32
  }
  func.func @transform_6(%arg0: i32) -> (i32, i32) {
    %c0_i32 = arith.constant 0 : i32
    %c0_i32_0 = arith.constant 0 : i32
    %c0_i32_1 = arith.constant 0 : i32
    return %c0_i32, %c0_i32_0 : i32, i32
  }
  func.func @transform_7(%arg0: i32) -> (i32, i32) {
    %c0_i32 = arith.constant 0 : i32
    %c0_i32_0 = arith.constant 0 : i32
    %c0_i32_1 = arith.constant 0 : i32
    return %c0_i32, %c0_i32_0 : i32, i32
  }
  func.func @transform_8(%arg0: i32) -> (i32, i32) {
    %c0_i32 = arith.constant 0 : i32
    %c0_i32_0 = arith.constant 0 : i32
    %c0_i32_1 = arith.constant 0 : i32
    return %c0_i32, %c0_i32_0 : i32, i32
  }
  func.func @transform_9(%arg0: i32) -> (i32, i32) {
    %c0_i32 = arith.constant 0 : i32
    %c0_i32_0 = arith.constant 0 : i32
    %c0_i32_1 = arith.constant 0 : i32
    return %c0_i32, %c0_i32_0 : i32, i32
  }
  func.func @transform_10(%arg0: i32) -> (i32, i32) {
    %c0_i32 = arith.constant 0 : i32
    %c0_i32_0 = arith.constant 0 : i32
    %c0_i32_1 = arith.constant 0 : i32
    return %c0_i32, %c0_i32_0 : i32, i32
  }
  func.func @transform_11(%arg0: i32) -> (i32, i32) {
    %c0_i32 = arith.constant 0 : i32
    %c0_i32_0 = arith.constant 0 : i32
    %c0_i32_1 = arith.constant 0 : i32
    return %c0_i32, %c0_i32_0 : i32, i32
  }
  func.func @transform_12(%arg0: i32) -> (i32, i32) {
    %c0_i32 = arith.constant 0 : i32
    %c0_i32_0 = arith.constant 0 : i32
    %c0_i32_1 = arith.constant 0 : i32
    return %c0_i32, %c0_i32_0 : i32, i32
  }
  func.func @transform_13(%arg0: i32) -> (i32, i32) {
    %c0_i32 = arith.constant 0 : i32
    %c0_i32_0 = arith.constant 0 : i32
    %c0_i32_1 = arith.constant 0 : i32
    return %c0_i32, %c0_i32_0 : i32, i32
  }
  func.func @transform_14(%arg0: i32) -> (i32, i32) {
    %c0_i32 = arith.constant 0 : i32
    %c0_i32_0 = arith.constant 0 : i32
    %c0_i32_1 = arith.constant 0 : i32
    return %c0_i32, %c0_i32_0 : i32, i32
  }
  func.func @transform_15(%arg0: i32) -> (i32, i32) {
    %c0_i32 = arith.constant 0 : i32
    %c0_i32_0 = arith.constant 0 : i32
    return %arg0, %c0_i32 : i32, i32
  }
}

</mosaic_0001>

<llo_original>
// kernel: tpu_custom_call.1
$region0: #{tpu_custom_call.1}
  #allocation0 [shape = 'u32[]', space=smem, size = 0x4, offset = 0x4, fixed_abs, tag = 'smem constant byte address 0x4 - core index']
  #allocation1 [shape = 'u32[144,128]{1,0:T(1,128)}', space=vmem, size = 0x12000, scoped, tag = 'internal scratch']
  %s0 = inlined_call_operand.hbm [shape: f32[2,768], index: 0, kind: input, shape index: {}]
  %s1 = inlined_call_operand.hbm [shape: bf16[768,512], index: 1, kind: input, shape index: {}]
  %s2 = inlined_call_operand.hbm [shape: f32[1,512], index: 2, kind: input, shape index: {}]
  %s3 = inlined_call_operand.hbm [shape: bf16[512,256], index: 3, kind: input, shape index: {}]
  %s4 = inlined_call_operand.vmem [shape: f32[1,256], index: 4, kind: input, shape index: {}]
  %s5 = inlined_call_operand.hbm [shape: bf16[256,128], index: 5, kind: input, shape index: {}]
  %s6 = inlined_call_operand.vmem [shape: f32[1,128], index: 6, kind: input, shape index: {}]
  %s7 = inlined_call_operand.hbm [shape: bf16[128,128], index: 7, kind: input, shape index: {}]
  %s8 = inlined_call_operand.vmem [shape: f32[1,128], index: 8, kind: input, shape index: {}]
  %s9 = inlined_call_operand.hbm [shape: bf16[128,128], index: 9, kind: input, shape index: {}]
  %s10 = inlined_call_operand.vmem [shape: f32[1,128], index: 10, kind: input, shape index: {}]
  %s11 = inlined_call_operand.hbm [shape: bf16[128,256], index: 11, kind: input, shape index: {}]
  %s12 = inlined_call_operand.vmem [shape: f32[1,256], index: 12, kind: input, shape index: {}]
  %s13 = inlined_call_operand.hbm [shape: bf16[256,128], index: 13, kind: input, shape index: {}]
  %s14 = inlined_call_operand.vmem [shape: f32[1,128], index: 14, kind: input, shape index: {}]
  %s15 = inlined_call_operand.hbm [shape: f32[2,128], index: 15, kind: output, shape index: {}]
  %s16 = sld [smem:[#allocation0]]
  $region106: #{tpu_custom_call.1} parent=0
    _
  %s18 = ssub.s32 1, %s16
  %s19 = scalar_select 0, %s18, %s16
  $region1: #{tpu_custom_call.1} parent=0
    #allocation2 [shape = 'u8[6144]{0}', space=vmem, size = 0x1800, scoped, tag = 'input window, operand 0, single buffered']
    #allocation3 [shape = 's32[1]{0}', space=sflag, size = 0x4, scoped, tag = 'scoped memory for tpu_custom_call.1']
    #allocation4 [shape = 's32[1]{0}', space=sflag, size = 0x4, scoped, tag = 'scoped memory for tpu_custom_call.1']
    #allocation5 [shape = 'u8[786432]{0}', space=vmem, size = 0xc0000, scoped, tag = 'input window, operand 1, single buffered']
    #allocation6 [shape = 's32[1]{0}', space=sflag, size = 0x4, scoped, tag = 'scoped memory for tpu_custom_call.1']
    #allocation7 [shape = 'u8[2048]{0}', space=vmem, size = 0x800, scoped, tag = 'input window, operand 2, single buffered']
    #allocation8 [shape = 'u8[262144]{0}', space=vmem, size = 0x40000, scoped, tag = 'input window, operand 3, single buffered']
    #allocation9 [shape = 's32[1]{0}', space=sflag, size = 0x4, scoped, tag = 'scoped memory for tpu_custom_call.1']
    #allocation10 [shape = 'u8[65536]{0}', space=vmem, size = 0x10000, scoped, tag = 'input window, operand 5, single buffered']
    #allocation11 [shape = 'u8[32768]{0}', space=vmem, size = 0x8000, scoped, tag = 'input window, operand 7, single buffered']
    #allocation12 [shape = 's32[1]{0}', space=sflag, size = 0x4, scoped, tag = 'scoped memory for tpu_custom_call.1']
    #allocation13 [shape = 'u8[32768]{0}', space=vmem, size = 0x8000, scoped, tag = 'input window, operand 9, single buffered']
    #allocation14 [shape = 'u8[65536]{0}', space=vmem, size = 0x10000, scoped, tag = 'input window, operand 11, single buffered']
    #allocation15 [shape = 's32[1]{0}', space=sflag, size = 0x4, scoped, tag = 'scoped memory for tpu_custom_call.1']
    #allocation16 [shape = 'u8[65536]{0}', space=vmem, size = 0x10000, scoped, tag = 'input window, operand 13, single buffered']
    #allocation17 [shape = 'u8[1024]{0}', space=vmem, size = 0x400, scoped, tag = 'output window, operand 0, single buffered']
    %20 = vsyncpa [#allocation3], 0
    %21 = vsyncpa [#allocation6], 0
    %22 = vsyncpa [#allocation9], 0
    %23 = vsyncpa [#allocation12], 0
    %24 = vsyncpa [#allocation15], 0
    %25 = vsyncpa [#allocation4], 0
    // Predicated region
    $region2: #{tpu_custom_call.1} parent=1 // pred_check
      _
    $region3: #{tpu_custom_call.1} parent=1 // pred_check_branch
      %27 = sbr.rel (0) target = $region5
    $region4: #{tpu_custom_call.1} parent=1 // pred_region
      %s29 = ssub.s32 192, 192
      %30 = vsyncadd [#allocation3], %s29
      %s32 = sshll.u32 [#allocation2], 4
      %s33 = int_to_ptr.vmem [resolvable:$true] %s32
      %35 = dma.hbm_to_vmem [thread:$0]  %s0, 192, %s33, [#allocation3]
    $region5: #{tpu_custom_call.1} parent=1 // pred_fallthru
      _
    // Predicated region
    $region6: #{tpu_custom_call.1} parent=1 // pred_check
      _
    $region7: #{tpu_custom_call.1} parent=1 // pred_check_branch
      %37 = sbr.rel (0) target = $region9
    $region8: #{tpu_custom_call.1} parent=1 // pred_region
      %s39 = ssub.s32 24576, 24576
      %40 = vsyncadd [#allocation6], %s39
      %s41 = sshll.u32 [#allocation5], 4
      %s42 = int_to_ptr.vmem [resolvable:$true] %s41
      %47 = dma.hbm_to_vmem [thread:$0]  %s1, 24576, %s42, [#allocation6], 256, 256, 16
    $region9: #{tpu_custom_call.1} parent=1 // pred_fallthru
      _
    // Predicated region
    $region10: #{tpu_custom_call.1} parent=1 // pred_check
      _
    $region11: #{tpu_custom_call.1} parent=1 // pred_check_branch
      %49 = sbr.rel (0) target = $region13
    $region12: #{tpu_custom_call.1} parent=1 // pred_region
      %s51 = ssub.s32 64, 64
      %52 = vsyncadd [#allocation6], %s51
      %s54 = sshll.u32 [#allocation7], 4
      %s55 = int_to_ptr.vmem [resolvable:$true] %s54
      %57 = dma.hbm_to_vmem [thread:$0]  %s2, 64, %s55, [#allocation6]
    $region13: #{tpu_custom_call.1} parent=1 // pred_fallthru
      _
    // Predicated region
    $region14: #{tpu_custom_call.1} parent=1 // pred_check
      _
    $region15: #{tpu_custom_call.1} parent=1 // pred_check_branch
      %59 = sbr.rel (0) target = $region17
    $region16: #{tpu_custom_call.1} parent=1 // pred_region
      %s61 = ssub.s32 8192, 8192
      %62 = vsyncadd [#allocation9], %s61
      %s63 = sshll.u32 [#allocation8], 4
      %s64 = int_to_ptr.vmem [resolvable:$true] %s63
      %69 = dma.hbm_to_vmem [thread:$0]  %s3, 8192, %s64, [#allocation9], 128, 128, 8
    $region17: #{tpu_custom_call.1} parent=1 // pred_fallthru
      _
    // Predicated region
    $region18: #{tpu_custom_call.1} parent=1 // pred_check
      _
    $region19: #{tpu_custom_call.1} parent=1 // pred_check_branch
      %71 = sbr.rel (0) target = $region21
    $region20: #{tpu_custom_call.1} parent=1 // pred_region
      _
    $region21: #{tpu_custom_call.1} parent=1 // pred_fallthru
      _
    // Predicated region
    $region22: #{tpu_custom_call.1} parent=1 // pred_check
      _
    $region23: #{tpu_custom_call.1} parent=1 // pred_check_branch
      %73 = sbr.rel (0) target = $region25
    $region24: #{tpu_custom_call.1} parent=1 // pred_region
      %s75 = ssub.s32 2048, 2048
      %76 = vsyncadd [#allocation9], %s75
      %s77 = sshll.u32 [#allocation10], 4
      %s78 = int_to_ptr.vmem [resolvable:$true] %s77
      %83 = dma.hbm_to_vmem [thread:$0]  %s5, 2048, %s78, [#allocation9], 64, 64, 4
    $region25: #{tpu_custom_call.1} parent=1 // pred_fallthru
      _
    // Predicated region
    $region26: #{tpu_custom_call.1} parent=1 // pred_check
      _
    $region27: #{tpu_custom_call.1} parent=1 // pred_check_branch
      %85 = sbr.rel (0) target = $region29
    $region28: #{tpu_custom_call.1} parent=1 // pred_region
      _
    $region29: #{tpu_custom_call.1} parent=1 // pred_fallthru
      _
    // Predicated region
    $region30: #{tpu_custom_call.1} parent=1 // pred_check
      _
    $region31: #{tpu_custom_call.1} parent=1 // pred_check_branch
      %87 = sbr.rel (0) target = $region33
    $region32: #{tpu_custom_call.1} parent=1 // pred_region
      %s89 = ssub.s32 1024, 1024
      %90 = vsyncadd [#allocation12], %s89
      %s91 = sshll.u32 [#allocation11], 4
      %s92 = int_to_ptr.vmem [resolvable:$true] %s91
      %97 = dma.hbm_to_vmem [thread:$0]  %s7, 1024, %s92, [#allocation12], 64, 64, 4
    $region33: #{tpu_custom_call.1} parent=1 // pred_fallthru
      _
    // Predicated region
    $region34: #{tpu_custom_call.1} parent=1 // pred_check
      _
    $region35: #{tpu_custom_call.1} parent=1 // pred_check_branch
      %99 = sbr.rel (0) target = $region37
    $region36: #{tpu_custom_call.1} parent=1 // pred_region
      _
    $region37: #{tpu_custom_call.1} parent=1 // pred_fallthru
      _
    // Predicated region
    $region38: #{tpu_custom_call.1} parent=1 // pred_check
      _
    $region39: #{tpu_custom_call.1} parent=1 // pred_check_branch
      %101 = sbr.rel (0) target = $region41
    $region40: #{tpu_custom_call.1} parent=1 // pred_region
      %s103 = ssub.s32 1024, 1024
      %104 = vsyncadd [#allocation12], %s103
      %s105 = sshll.u32 [#allocation13], 4
      %s106 = int_to_ptr.vmem [resolvable:$true] %s105
      %111 = dma.hbm_to_vmem [thread:$0]  %s9, 1024, %s106, [#allocation12], 64, 64, 4
    $region41: #{tpu_custom_call.1} parent=1 // pred_fallthru
      _
    // Predicated region
    $region42: #{tpu_custom_call.1} parent=1 // pred_check
      _
    $region43: #{tpu_custom_call.1} parent=1 // pred_check_branch
      %113 = sbr.rel (0) target = $region45
    $region44: #{tpu_custom_call.1} parent=1 // pred_region
      _
    $region45: #{tpu_custom_call.1} parent=1 // pred_fallthru
      _
    // Predicated region
    $region46: #{tpu_custom_call.1} parent=1 // pred_check
      _
    $region47: #{tpu_custom_call.1} parent=1 // pred_check_branch
      %115 = sbr.rel (0) target = $region49
    $region48: #{tpu_custom_call.1} parent=1 // pred_region
      %s117 = ssub.s32 2048, 2048
      %118 = vsyncadd [#allocation15], %s117
      %s119 = sshll.u32 [#allocation14], 4
      %s120 = int_to_ptr.vmem [resolvable:$true] %s119
      %125 = dma.hbm_to_vmem [thread:$0]  %s11, 2048, %s120, [#allocation15], 128, 128, 8
    $region49: #{tpu_custom_call.1} parent=1 // pred_fallthru
      _
    // Predicated region
    $region50: #{tpu_custom_call.1} parent=1 // pred_check
      _
    $region51: #{tpu_custom_call.1} parent=1 // pred_check_branch
      %127 = sbr.rel (0) target = $region53
    $region52: #{tpu_custom_call.1} parent=1 // pred_region
      _
    $region53: #{tpu_custom_call.1} parent=1 // pred_fallthru
      _
    // Predicated region
    $region54: #{tpu_custom_call.1} parent=1 // pred_check
      _
    $region55: #{tpu_custom_call.1} parent=1 // pred_check_branch
      %129 = sbr.rel (0) target = $region57
    $region56: #{tpu_custom_call.1} parent=1 // pred_region
      %s131 = ssub.s32 2048, 2048
      %132 = vsyncadd [#allocation15], %s131
      %s133 = sshll.u32 [#allocation16], 4
      %s134 = int_to_ptr.vmem [resolvable:$true] %s133
      %139 = dma.hbm_to_vmem [thread:$0]  %s13, 2048, %s134, [#allocation15], 64, 64, 4
    $region57: #{tpu_custom_call.1} parent=1 // pred_fallthru
      _
    // Predicated region
    $region58: #{tpu_custom_call.1} parent=1 // pred_check
      _
    $region59: #{tpu_custom_call.1} parent=1 // pred_check_branch
      %141 = sbr.rel (0) target = $region61
    $region60: #{tpu_custom_call.1} parent=1 // pred_region
      _
    $region61: #{tpu_custom_call.1} parent=1 // pred_fallthru
      _
    // Predicated region
    $region62: #{tpu_custom_call.1} parent=1 // pred_check
      _
    $region63: #{tpu_custom_call.1} parent=1 // pred_check_branch
      %143 = sbr.rel (0) target = $region65
    $region64: #{tpu_custom_call.1} parent=1 // pred_region
      %144 = dma.done [#allocation3], 192
    $region65: #{tpu_custom_call.1} parent=1 // pred_fallthru
      _
    // Predicated region
    $region66: #{tpu_custom_call.1} parent=1 // pred_check
      _
    $region67: #{tpu_custom_call.1} parent=1 // pred_check_branch
      %146 = sbr.rel (0) target = $region69
    $region68: #{tpu_custom_call.1} parent=1 // pred_region
      %147 = dma.done [#allocation6], 24576
    $region69: #{tpu_custom_call.1} parent=1 // pred_fallthru
      _
    // Predicated region
    $region70: #{tpu_custom_call.1} parent=1 // pred_check
      _
    $region71: #{tpu_custom_call.1} parent=1 // pred_check_branch
      %149 = sbr.rel (0) target = $region73
    $region72: #{tpu_custom_call.1} parent=1 // pred_region
      %150 = dma.done [#allocation6], 64
    $region73: #{tpu_custom_call.1} parent=1 // pred_fallthru
      _
    // Predicated region
    $region74: #{tpu_custom_call.1} parent=1 // pred_check
      _
    $region75: #{tpu_custom_call.1} parent=1 // pred_check_branch
      %152 = sbr.rel (0) target = $region77
    $region76: #{tpu_custom_call.1} parent=1 // pred_region
      %153 = dma.done [#allocation9], 8192
    $region77: #{tpu_custom_call.1} parent=1 // pred_fallthru
      _
    // Predicated region
    $region78: #{tpu_custom_call.1} parent=1 // pred_check
      _
    $region79: #{tpu_custom_call.1} parent=1 // pred_check_branch
      %155 = sbr.rel (0) target = $region81
    $region80: #{tpu_custom_call.1} parent=1 // pred_region
      %156 = dma.done [#allocation9], 2048
    $region81: #{tpu_custom_call.1} parent=1 // pred_fallthru
      _
    // Predicated region
    $region82: #{tpu_custom_call.1} parent=1 // pred_check
      _
    $region83: #{tpu_custom_call.1} parent=1 // pred_check_branch
      %158 = sbr.rel (0) target = $region85
    $region84: #{tpu_custom_call.1} parent=1 // pred_region
      %159 = dma.done [#allocation12], 1024
    $region85: #{tpu_custom_call.1} parent=1 // pred_fallthru
      _
    // Predicated region
    $region86: #{tpu_custom_call.1} parent=1 // pred_check
      _
    $region87: #{tpu_custom_call.1} parent=1 // pred_check_branch
      %161 = sbr.rel (0) target = $region89
    $region88: #{tpu_custom_call.1} parent=1 // pred_region
      %162 = dma.done [#allocation12], 1024
    $region89: #{tpu_custom_call.1} parent=1 // pred_fallthru
      _
    // Predicated region
    $region90: #{tpu_custom_call.1} parent=1 // pred_check
      _
    $region91: #{tpu_custom_call.1} parent=1 // pred_check_branch
      %164 = sbr.rel (0) target = $region93
    $region92: #{tpu_custom_call.1} parent=1 // pred_region
      %165 = dma.done [#allocation15], 2048
    $region93: #{tpu_custom_call.1} parent=1 // pred_fallthru
      _
    // Predicated region
    $region94: #{tpu_custom_call.1} parent=1 // pred_check
      _
    $region95: #{tpu_custom_call.1} parent=1 // pred_check_branch
      %167 = sbr.rel (0) target = $region97
    $region96: #{tpu_custom_call.1} parent=1 // pred_region
      %168 = dma.done [#allocation15], 2048
    $region97: #{tpu_custom_call.1} parent=1 // pred_fallthru
      _
    %v170 = vld [vmem:[#allocation2] sm:$0xff]
    %v171 = vld [vmem:[#allocation2 + $0x8] sm:$0xf]
    %v172 = vld [vmem:[#allocation5] sm:$0xff]
    %v173 = vld [vmem:[#allocation5 + $0x8] sm:$0xff]
    %v174 = vld [vmem:[#allocation5 + $0x10] sm:$0xff]
    %v175 = vld [vmem:[#allocation5 + $0x18] sm:$0xff]
    %v176 = vld [vmem:[#allocation5 + $0x20] sm:$0xff]
    %v177 = vld [vmem:[#allocation5 + $0x28] sm:$0xff]
    %v178 = vld [vmem:[#allocation5 + $0x30] sm:$0xff]
    %v179 = vld [vmem:[#allocation5 + $0x38] sm:$0xff]
    %v180 = vld [vmem:[#allocation5 + $0x40] sm:$0xff]
    %v181 = vld [vmem:[#allocation5 + $0x48] sm:$0xff]
    %v182 = vld [vmem:[#allocation5 + $0x50] sm:$0xff]
    %v183 = vld [vmem:[#allocation5 + $0x58] sm:$0xff]
    %v184 = vld [vmem:[#allocation5 + $0x60] sm:$0xff]
    %v185 = vld [vmem:[#allocation5 + $0x68] sm:$0xff]
    %v186 = vld [vmem:[#allocation5 + $0x70] sm:$0xff]
    %v187 = vld [vmem:[#allocation5 + $0x78] sm:$0xff]
    %v188 = vld [vmem:[#allocation5 + $0x80] sm:$0xff]
    %v189 = vld [vmem:[#allocation5 + $0x88] sm:$0xff]
    %v190 = vld [vmem:[#allocation5 + $0x90] sm:$0xff]
    %v191 = vld [vmem:[#allocation5 + $0x98] sm:$0xff]
    %v192 = vld [vmem:[#allocation5 + $0xa0] sm:$0xff]
    %v193 = vld [vmem:[#allocation5 + $0xa8] sm:$0xff]
    %v194 = vld [vmem:[#allocation5 + $0xb0] sm:$0xff]
    %v195 = vld [vmem:[#allocation5 + $0xb8] sm:$0xff]
    %v196 = vld [vmem:[#allocation5 + $0xc0] sm:$0xff]
    %v197 = vld [vmem:[#allocation5 + $0xc8] sm:$0xff]
    %v198 = vld [vmem:[#allocation5 + $0xd0] sm:$0xff]
    %v199 = vld [vmem:[#allocation5 + $0xd8] sm:$0xff]
    %v200 = vld [vmem:[#allocation5 + $0xe0] sm:$0xff]
    %v201 = vld [vmem:[#allocation5 + $0xe8] sm:$0xff]
    %v202 = vld [vmem:[#allocation5 + $0xf0] sm:$0xff]
    %v203 = vld [vmem:[#allocation5 + $0xf8] sm:$0xff]
    %v204 = vld [vmem:[#allocation5 + $0x100] sm:$0xff]
    %v205 = vld [vmem:[#allocation5 + $0x108] sm:$0xff]
    %v206 = vld [vmem:[#allocation5 + $0x110] sm:$0xff]
    %v207 = vld [vmem:[#allocation5 + $0x118] sm:$0xff]
    %v208 = vld [vmem:[#allocation5 + $0x120] sm:$0xff]
    %v209 = vld [vmem:[#allocation5 + $0x128] sm:$0xff]
    %v210 = vld [vmem:[#allocation5 + $0x130] sm:$0xff]
    %v211 = vld [vmem:[#allocation5 + $0x138] sm:$0xff]
    %v212 = vld [vmem:[#allocation5 + $0x140] sm:$0xff]
    %v213 = vld [vmem:[#allocation5 + $0x148] sm:$0xff]
    %v214 = vld [vmem:[#allocation5 + $0x150] sm:$0xff]
    %v215 = vld [vmem:[#allocation5 + $0x158] sm:$0xff]
    %v216 = vld [vmem:[#allocation5 + $0x160] sm:$0xff]
    %v217 = vld [vmem:[#allocation5 + $0x168] sm:$0xff]
    %v218 = vld [vmem:[#allocation5 + $0x170] sm:$0xff]
    %v219 = vld [vmem:[#allocation5 + $0x178] sm:$0xff]
    %v220 = vld [vmem:[#allocation5 + $0x180] sm:$0xff]
    %v221 = vld [vmem:[#allocation5 + $0x188] sm:$0xff]
    %v222 = vld [vmem:[#allocation5 + $0x190] sm:$0xff]
    %v223 = vld [vmem:[#allocation5 + $0x198] sm:$0xff]
    %v224 = vld [vmem:[#allocation5 + $0x1a0] sm:$0xff]
    %v225 = vld [vmem:[#allocation5 + $0x1a8] sm:$0xff]
    %v226 = vld [vmem:[#allocation5 + $0x1b0] sm:$0xff]
    %v227 = vld [vmem:[#allocation5 + $0x1b8] sm:$0xff]
    %v228 = vld [vmem:[#allocation5 + $0x1c0] sm:$0xff]
    %v229 = vld [vmem:[#allocation5 + $0x1c8] sm:$0xff]
    %v230 = vld [vmem:[#allocation5 + $0x1d0] sm:$0xff]
    %v231 = vld [vmem:[#allocation5 + $0x1d8] sm:$0xff]
    %v232 = vld [vmem:[#allocation5 + $0x1e0] sm:$0xff]
    %v233 = vld [vmem:[#allocation5 + $0x1e8] sm:$0xff]
    %v234 = vld [vmem:[#allocation5 + $0x1f0] sm:$0xff]
    %v235 = vld [vmem:[#allocation5 + $0x1f8] sm:$0xff]
    %v236 = vld [vmem:[#allocation5 + $0x200] sm:$0xff]
    %v237 = vld [vmem:[#allocation5 + $0x208] sm:$0xff]
    %v238 = vld [vmem:[#allocation5 + $0x210] sm:$0xff]
    %v239 = vld [vmem:[#allocation5 + $0x218] sm:$0xff]
    %v240 = vld [vmem:[#allocation5 + $0x220] sm:$0xff]
    %v241 = vld [vmem:[#allocation5 + $0x228] sm:$0xff]
    %v242 = vld [vmem:[#allocation5 + $0x230] sm:$0xff]
    %v243 = vld [vmem:[#allocation5 + $0x238] sm:$0xff]
    %v244 = vld [vmem:[#allocation5 + $0x240] sm:$0xff]
    %v245 = vld [vmem:[#allocation5 + $0x248] sm:$0xff]
    %v246 = vld [vmem:[#allocation5 + $0x250] sm:$0xff]
    %v247 = vld [vmem:[#allocation5 + $0x258] sm:$0xff]
    %v248 = vld [vmem:[#allocation5 + $0x260] sm:$0xff]
    %v249 = vld [vmem:[#allocation5 + $0x268] sm:$0xff]
    %v250 = vld [vmem:[#allocation5 + $0x270] sm:$0xff]
    %v251 = vld [vmem:[#allocation5 + $0x278] sm:$0xff]
    %v252 = vld [vmem:[#allocation5 + $0x280] sm:$0xff]
    %v253 = vld [vmem:[#allocation5 + $0x288] sm:$0xff]
    %v254 = vld [vmem:[#allocation5 + $0x290] sm:$0xff]
    %v255 = vld [vmem:[#allocation5 + $0x298] sm:$0xff]
    %v256 = vld [vmem:[#allocation5 + $0x2a0] sm:$0xff]
    %v257 = vld [vmem:[#allocation5 + $0x2a8] sm:$0xff]
    %v258 = vld [vmem:[#allocation5 + $0x2b0] sm:$0xff]
    %v259 = vld [vmem:[#allocation5 + $0x2b8] sm:$0xff]
    %v260 = vld [vmem:[#allocation5 + $0x2c0] sm:$0xff]
    %v261 = vld [vmem:[#allocation5 + $0x2c8] sm:$0xff]
    %v262 = vld [vmem:[#allocation5 + $0x2d0] sm:$0xff]
    %v263 = vld [vmem:[#allocation5 + $0x2d8] sm:$0xff]
    %v264 = vld [vmem:[#allocation5 + $0x2e0] sm:$0xff]
    %v265 = vld [vmem:[#allocation5 + $0x2e8] sm:$0xff]
    %v266 = vld [vmem:[#allocation5 + $0x2f0] sm:$0xff]
    %v267 = vld [vmem:[#allocation5 + $0x2f8] sm:$0xff]
    %v268 = vld [vmem:[#allocation5 + $0x300] sm:$0xff]
    %v269 = vld [vmem:[#allocation5 + $0x308] sm:$0xff]
    %v270 = vld [vmem:[#allocation5 + $0x310] sm:$0xff]
    %v271 = vld [vmem:[#allocation5 + $0x318] sm:$0xff]
    %v272 = vld [vmem:[#allocation5 + $0x320] sm:$0xff]
    %v273 = vld [vmem:[#allocation5 + $0x328] sm:$0xff]
    %v274 = vld [vmem:[#allocation5 + $0x330] sm:$0xff]
    %v275 = vld [vmem:[#allocation5 + $0x338] sm:$0xff]
    %v276 = vld [vmem:[#allocation5 + $0x340] sm:$0xff]
    %v277 = vld [vmem:[#allocation5 + $0x348] sm:$0xff]
    %v278 = vld [vmem:[#allocation5 + $0x350] sm:$0xff]
    %v279 = vld [vmem:[#allocation5 + $0x358] sm:$0xff]
    %v280 = vld [vmem:[#allocation5 + $0x360] sm:$0xff]
    %v281 = vld [vmem:[#allocation5 + $0x368] sm:$0xff]
    %v282 = vld [vmem:[#allocation5 + $0x370] sm:$0xff]
    %v283 = vld [vmem:[#allocation5 + $0x378] sm:$0xff]
    %v284 = vld [vmem:[#allocation5 + $0x380] sm:$0xff]
    %v285 = vld [vmem:[#allocation5 + $0x388] sm:$0xff]
    %v286 = vld [vmem:[#allocation5 + $0x390] sm:$0xff]
    %v287 = vld [vmem:[#allocation5 + $0x398] sm:$0xff]
    %v288 = vld [vmem:[#allocation5 + $0x3a0] sm:$0xff]
    %v289 = vld [vmem:[#allocation5 + $0x3a8] sm:$0xff]
    %v290 = vld [vmem:[#allocation5 + $0x3b0] sm:$0xff]
    %v291 = vld [vmem:[#allocation5 + $0x3b8] sm:$0xff]
    %v292 = vld [vmem:[#allocation5 + $0x3c0] sm:$0xff]
    %v293 = vld [vmem:[#allocation5 + $0x3c8] sm:$0xff]
    %v294 = vld [vmem:[#allocation5 + $0x3d0] sm:$0xff]
    %v295 = vld [vmem:[#allocation5 + $0x3d8] sm:$0xff]
    %v296 = vld [vmem:[#allocation5 + $0x3e0] sm:$0xff]
    %v297 = vld [vmem:[#allocation5 + $0x3e8] sm:$0xff]
    %v298 = vld [vmem:[#allocation5 + $0x3f0] sm:$0xff]
    %v299 = vld [vmem:[#allocation5 + $0x3f8] sm:$0xff]
    %v300 = vld [vmem:[#allocation5 + $0x400] sm:$0xff]
    %v301 = vld [vmem:[#allocation5 + $0x408] sm:$0xff]
    %v302 = vld [vmem:[#allocation5 + $0x410] sm:$0xff]
    %v303 = vld [vmem:[#allocation5 + $0x418] sm:$0xff]
    %v304 = vld [vmem:[#allocation5 + $0x420] sm:$0xff]
    %v305 = vld [vmem:[#allocation5 + $0x428] sm:$0xff]
    %v306 = vld [vmem:[#allocation5 + $0x430] sm:$0xff]
    %v307 = vld [vmem:[#allocation5 + $0x438] sm:$0xff]
    %v308 = vld [vmem:[#allocation5 + $0x440] sm:$0xff]
    %v309 = vld [vmem:[#allocation5 + $0x448] sm:$0xff]
    %v310 = vld [vmem:[#allocation5 + $0x450] sm:$0xff]
    %v311 = vld [vmem:[#allocation5 + $0x458] sm:$0xff]
    %v312 = vld [vmem:[#allocation5 + $0x460] sm:$0xff]
    %v313 = vld [vmem:[#allocation5 + $0x468] sm:$0xff]
    %v314 = vld [vmem:[#allocation5 + $0x470] sm:$0xff]
    %v315 = vld [vmem:[#allocation5 + $0x478] sm:$0xff]
    %v316 = vld [vmem:[#allocation5 + $0x480] sm:$0xff]
    %v317 = vld [vmem:[#allocation5 + $0x488] sm:$0xff]
    %v318 = vld [vmem:[#allocation5 + $0x490] sm:$0xff]
    %v319 = vld [vmem:[#allocation5 + $0x498] sm:$0xff]
    %v320 = vld [vmem:[#allocation5 + $0x4a0] sm:$0xff]
    %v321 = vld [vmem:[#allocation5 + $0x4a8] sm:$0xff]
    %v322 = vld [vmem:[#allocation5 + $0x4b0] sm:$0xff]
    %v323 = vld [vmem:[#allocation5 + $0x4b8] sm:$0xff]
    %v324 = vld [vmem:[#allocation5 + $0x4c0] sm:$0xff]
    %v325 = vld [vmem:[#allocation5 + $0x4c8] sm:$0xff]
    %v326 = vld [vmem:[#allocation5 + $0x4d0] sm:$0xff]
    %v327 = vld [vmem:[#allocation5 + $0x4d8] sm:$0xff]
    %v328 = vld [vmem:[#allocation5 + $0x4e0] sm:$0xff]
    %v329 = vld [vmem:[#allocation5 + $0x4e8] sm:$0xff]
    %v330 = vld [vmem:[#allocation5 + $0x4f0] sm:$0xff]
    %v331 = vld [vmem:[#allocation5 + $0x4f8] sm:$0xff]
    %v332 = vld [vmem:[#allocation5 + $0x500] sm:$0xff]
    %v333 = vld [vmem:[#allocation5 + $0x508] sm:$0xff]
    %v334 = vld [vmem:[#allocation5 + $0x510] sm:$0xff]
    %v335 = vld [vmem:[#allocation5 + $0x518] sm:$0xff]
    %v336 = vld [vmem:[#allocation5 + $0x520] sm:$0xff]
    %v337 = vld [vmem:[#allocation5 + $0x528] sm:$0xff]
    %v338 = vld [vmem:[#allocation5 + $0x530] sm:$0xff]
    %v339 = vld [vmem:[#allocation5 + $0x538] sm:$0xff]
    %v340 = vld [vmem:[#allocation5 + $0x540] sm:$0xff]
    %v341 = vld [vmem:[#allocation5 + $0x548] sm:$0xff]
    %v342 = vld [vmem:[#allocation5 + $0x550] sm:$0xff]
    %v343 = vld [vmem:[#allocation5 + $0x558] sm:$0xff]
    %v344 = vld [vmem:[#allocation5 + $0x560] sm:$0xff]
    %v345 = vld [vmem:[#allocation5 + $0x568] sm:$0xff]
    %v346 = vld [vmem:[#allocation5 + $0x570] sm:$0xff]
    %v347 = vld [vmem:[#allocation5 + $0x578] sm:$0xff]
    %v348 = vld [vmem:[#allocation5 + $0x580] sm:$0xff]
    %v349 = vld [vmem:[#allocation5 + $0x588] sm:$0xff]
    %v350 = vld [vmem:[#allocation5 + $0x590] sm:$0xff]
    %v351 = vld [vmem:[#allocation5 + $0x598] sm:$0xff]
    %v352 = vld [vmem:[#allocation5 + $0x5a0] sm:$0xff]
    %v353 = vld [vmem:[#allocation5 + $0x5a8] sm:$0xff]
    %v354 = vld [vmem:[#allocation5 + $0x5b0] sm:$0xff]
    %v355 = vld [vmem:[#allocation5 + $0x5b8] sm:$0xff]
    %v356 = vld [vmem:[#allocation5 + $0x5c0] sm:$0xff]
    %v357 = vld [vmem:[#allocation5 + $0x5c8] sm:$0xff]
    %v358 = vld [vmem:[#allocation5 + $0x5d0] sm:$0xff]
    %v359 = vld [vmem:[#allocation5 + $0x5d8] sm:$0xff]
    %v360 = vld [vmem:[#allocation5 + $0x5e0] sm:$0xff]
    %v361 = vld [vmem:[#allocation5 + $0x5e8] sm:$0xff]
    %v362 = vld [vmem:[#allocation5 + $0x5f0] sm:$0xff]
    %v363 = vld [vmem:[#allocation5 + $0x5f8] sm:$0xff]
    %v364 = vld [vmem:[#allocation7] sm:$0xf]
    %v367 = vcombine.high %v170, %v170
    %v369 = vunpack.c.l.s4 1983009808
    %v370 = vunpack.c.0.s8 %v369
    %v371 = vlaneseq
    %v372 = vshrl.u32 %v371, 7
    %v373 = vsub.s32 %v370, %v372
    %v374 = vrot.slane %v170, %v373
    %v376 = vunpack.c.l.s4 1983009808
    %v377 = vunpack.c.0.s8 %v376
    %v378 = vlaneseq
    %v379 = vshrl.u32 %v378, 7
    %v380 = vsub.s32 %v377, %v379
    %v381 = vrot.slane %v367, %v380
    %v382 = vcombine.high %v374, %v374
    %v383 = vcombine.high %v381, %v381
    %v385 = vunpack.c.l.s4 1983009808
    %v386 = vunpack.c.0.s8 %v385
    %v387 = vlaneseq
    %v388 = vshrl.u32 %v387, 7
    %v389 = vsub.s32 %v386, %v388
    %v390 = vrot.slane %v171, %v389
    %v391 = vcombine.high %v390, %v390
    %v398 = vpack.c.bf16 %v374, %v374
    %v399 = vpack.c.bf16 %v382, %v382
    %v400 = vpack.c.bf16 %v381, %v381
    %v401 = vpack.c.bf16 %v383, %v383
    %v402 = vpack.c.bf16 %v390, %v390
    %v403 = vpack.c.bf16 %v391, %v391
    %v405 = vlaneseq
    %v406 = vshrl.u32 %v405, 7
    %v407 = vsub.s32 0, %v406
    %v408 = vrot.slane %v364, %v407
    %v409 = vlaneseq
    %v410 = vshrl.u32 %v409, 7
    %v411 = vsub.s32 1, %v410
    %v412 = vrot.slane %v364, %v411
    %v413 = vlaneseq
    %v414 = vshrl.u32 %v413, 7
    %v415 = vsub.s32 2, %v414
    %v416 = vrot.slane %v364, %v415
    %v417 = vlaneseq
    %v418 = vshrl.u32 %v417, 7
    %v419 = vsub.s32 3, %v418
    %v420 = vrot.slane %v364, %v419
    %v617 = vunpack.c.l.b16 %v172
    %v618 = vunpack.c.h.b16 %v172
    %v619 = vunpack.c.l.b16 %v173
    %v620 = vunpack.c.h.b16 %v173
    %v621 = vunpack.c.l.b16 %v174
    %v622 = vunpack.c.h.b16 %v174
    %v623 = vunpack.c.l.b16 %v175
    %v624 = vunpack.c.h.b16 %v175
    %v625 = vunpack.c.l.b16 %v176
    %v626 = vunpack.c.h.b16 %v176
    %v627 = vunpack.c.l.b16 %v177
    %v628 = vunpack.c.h.b16 %v177
    %v629 = vunpack.c.l.b16 %v178
    %v630 = vunpack.c.h.b16 %v178
    %v631 = vunpack.c.l.b16 %v179
    %v632 = vunpack.c.h.b16 %v179
    %v633 = vunpack.c.l.b16 %v180
    %v634 = vunpack.c.h.b16 %v180
    %v635 = vunpack.c.l.b16 %v181
    %v636 = vunpack.c.h.b16 %v181
    %v637 = vunpack.c.l.b16 %v182
    %v638 = vunpack.c.h.b16 %v182
    %v639 = vunpack.c.l.b16 %v183
    %v640 = vunpack.c.h.b16 %v183
    %v641 = vunpack.c.l.b16 %v184
    %v642 = vunpack.c.h.b16 %v184
    %v643 = vunpack.c.l.b16 %v185
    %v644 = vunpack.c.h.b16 %v185
    %v645 = vunpack.c.l.b16 %v186
    %v646 = vunpack.c.h.b16 %v186
    %v647 = vunpack.c.l.b16 %v187
    %v648 = vunpack.c.h.b16 %v187
    %v649 = vunpack.c.l.b16 %v188
    %v650 = vunpack.c.h.b16 %v188
    %v651 = vunpack.c.l.b16 %v189
    %v652 = vunpack.c.h.b16 %v189
    %v653 = vunpack.c.l.b16 %v190
    %v654 = vunpack.c.h.b16 %v190
    %v655 = vunpack.c.l.b16 %v191
    %v656 = vunpack.c.h.b16 %v191
    %v657 = vunpack.c.l.b16 %v192
    %v658 = vunpack.c.h.b16 %v192
    %v659 = vunpack.c.l.b16 %v193
    %v660 = vunpack.c.h.b16 %v193
    %v661 = vunpack.c.l.b16 %v194
    %v662 = vunpack.c.h.b16 %v194
    %v663 = vunpack.c.l.b16 %v195
    %v664 = vunpack.c.h.b16 %v195
    %v665 = vunpack.c.l.b16 %v196
    %v666 = vunpack.c.h.b16 %v196
    %v667 = vunpack.c.l.b16 %v197
    %v668 = vunpack.c.h.b16 %v197
    %v669 = vunpack.c.l.b16 %v198
    %v670 = vunpack.c.h.b16 %v198
    %v671 = vunpack.c.l.b16 %v199
    %v672 = vunpack.c.h.b16 %v199
    %v673 = vunpack.c.l.b16 %v200
    %v674 = vunpack.c.h.b16 %v200
    %v675 = vunpack.c.l.b16 %v201
    %v676 = vunpack.c.h.b16 %v201
    %v677 = vunpack.c.l.b16 %v202
    %v678 = vunpack.c.h.b16 %v202
    %v679 = vunpack.c.l.b16 %v203
    %v680 = vunpack.c.h.b16 %v203
    %v681 = vunpack.c.l.b16 %v204
    %v682 = vunpack.c.h.b16 %v204
    %v683 = vunpack.c.l.b16 %v205
    %v684 = vunpack.c.h.b16 %v205
    %v685 = vunpack.c.l.b16 %v206
    %v686 = vunpack.c.h.b16 %v206
    %v687 = vunpack.c.l.b16 %v207
    %v688 = vunpack.c.h.b16 %v207
    %v689 = vunpack.c.l.b16 %v208
    %v690 = vunpack.c.h.b16 %v208
    %v691 = vunpack.c.l.b16 %v209
    %v692 = vunpack.c.h.b16 %v209
    %v693 = vunpack.c.l.b16 %v210
    %v694 = vunpack.c.h.b16 %v210
    %v695 = vunpack.c.l.b16 %v211
    %v696 = vunpack.c.h.b16 %v211
    %v697 = vunpack.c.l.b16 %v212
    %v698 = vunpack.c.h.b16 %v212
    %v699 = vunpack.c.l.b16 %v213
    %v700 = vunpack.c.h.b16 %v213
    %v701 = vunpack.c.l.b16 %v214
    %v702 = vunpack.c.h.b16 %v214
    %v703 = vunpack.c.l.b16 %v215
    %v704 = vunpack.c.h.b16 %v215
    %v705 = vunpack.c.l.b16 %v216
    %v706 = vunpack.c.h.b16 %v216
    %v707 = vunpack.c.l.b16 %v217
    %v708 = vunpack.c.h.b16 %v217
    %v709 = vunpack.c.l.b16 %v218
    %v710 = vunpack.c.h.b16 %v218
    %v711 = vunpack.c.l.b16 %v219
    %v712 = vunpack.c.h.b16 %v219
    %v713 = vunpack.c.l.b16 %v220
    %v714 = vunpack.c.h.b16 %v220
    %v715 = vunpack.c.l.b16 %v221
    %v716 = vunpack.c.h.b16 %v221
    %v717 = vunpack.c.l.b16 %v222
    %v718 = vunpack.c.h.b16 %v222
    %v719 = vunpack.c.l.b16 %v223
    %v720 = vunpack.c.h.b16 %v223
    %v721 = vunpack.c.l.b16 %v224
    %v722 = vunpack.c.h.b16 %v224
    %v723 = vunpack.c.l.b16 %v225
    %v724 = vunpack.c.h.b16 %v225
    %v725 = vunpack.c.l.b16 %v226
    %v726 = vunpack.c.h.b16 %v226
    %v727 = vunpack.c.l.b16 %v227
    %v728 = vunpack.c.h.b16 %v227
    %v729 = vunpack.c.l.b16 %v228
    %v730 = vunpack.c.h.b16 %v228
    %v731 = vunpack.c.l.b16 %v229
    %v732 = vunpack.c.h.b16 %v229
    %v733 = vunpack.c.l.b16 %v230
    %v734 = vunpack.c.h.b16 %v230
    %v735 = vunpack.c.l.b16 %v231
    %v736 = vunpack.c.h.b16 %v231
    %v737 = vunpack.c.l.b16 %v232
    %v738 = vunpack.c.h.b16 %v232
    %v739 = vunpack.c.l.b16 %v233
    %v740 = vunpack.c.h.b16 %v233
    %v741 = vunpack.c.l.b16 %v234
    %v742 = vunpack.c.h.b16 %v234
    %v743 = vunpack.c.l.b16 %v235
    %v744 = vunpack.c.h.b16 %v235
    %v745 = vunpack.c.l.b16 %v236
    %v746 = vunpack.c.h.b16 %v236
    %v747 = vunpack.c.l.b16 %v237
    %v748 = vunpack.c.h.b16 %v237
    %v749 = vunpack.c.l.b16 %v238
    %v750 = vunpack.c.h.b16 %v238
    %v751 = vunpack.c.l.b16 %v239
    %v752 = vunpack.c.h.b16 %v239
    %v753 = vunpack.c.l.b16 %v240
    %v754 = vunpack.c.h.b16 %v240
    %v755 = vunpack.c.l.b16 %v241
    %v756 = vunpack.c.h.b16 %v241
    %v757 = vunpack.c.l.b16 %v242
    %v758 = vunpack.c.h.b16 %v242
    %v759 = vunpack.c.l.b16 %v243
    %v760 = vunpack.c.h.b16 %v243
    %v761 = vunpack.c.l.b16 %v244
    %v762 = vunpack.c.h.b16 %v244
    %v763 = vunpack.c.l.b16 %v245
    %v764 = vunpack.c.h.b16 %v245
    %v765 = vunpack.c.l.b16 %v246
    %v766 = vunpack.c.h.b16 %v246
    %v767 = vunpack.c.l.b16 %v247
    %v768 = vunpack.c.h.b16 %v247
    %v769 = vunpack.c.l.b16 %v248
    %v770 = vunpack.c.h.b16 %v248
    %v771 = vunpack.c.l.b16 %v249
    %v772 = vunpack.c.h.b16 %v249
    %v773 = vunpack.c.l.b16 %v250
    %v774 = vunpack.c.h.b16 %v250
    %v775 = vunpack.c.l.b16 %v251
    %v776 = vunpack.c.h.b16 %v251
    %v777 = vunpack.c.l.b16 %v252
    %v778 = vunpack.c.h.b16 %v252
    %v779 = vunpack.c.l.b16 %v253
    %v780 = vunpack.c.h.b16 %v253
    %v781 = vunpack.c.l.b16 %v254
    %v782 = vunpack.c.h.b16 %v254
    %v783 = vunpack.c.l.b16 %v255
    %v784 = vunpack.c.h.b16 %v255
    %v785 = vunpack.c.l.b16 %v256
    %v786 = vunpack.c.h.b16 %v256
    %v787 = vunpack.c.l.b16 %v257
    %v788 = vunpack.c.h.b16 %v257
    %v789 = vunpack.c.l.b16 %v258
    %v790 = vunpack.c.h.b16 %v258
    %v791 = vunpack.c.l.b16 %v259
    %v792 = vunpack.c.h.b16 %v259
    %v793 = vunpack.c.l.b16 %v260
    %v794 = vunpack.c.h.b16 %v260
    %v795 = vunpack.c.l.b16 %v261
    %v796 = vunpack.c.h.b16 %v261
    %v797 = vunpack.c.l.b16 %v262
    %v798 = vunpack.c.h.b16 %v262
    %v799 = vunpack.c.l.b16 %v263
    %v800 = vunpack.c.h.b16 %v263
    %v801 = vunpack.c.l.b16 %v264
    %v802 = vunpack.c.h.b16 %v264
    %v803 = vunpack.c.l.b16 %v265
    %v804 = vunpack.c.h.b16 %v265
    %v805 = vunpack.c.l.b16 %v266
    %v806 = vunpack.c.h.b16 %v266
    %v807 = vunpack.c.l.b16 %v267
    %v808 = vunpack.c.h.b16 %v267
    %v809 = vunpack.c.l.b16 %v268
    %v810 = vunpack.c.h.b16 %v268
    %v811 = vunpack.c.l.b16 %v269
    %v812 = vunpack.c.h.b16 %v269
    %v813 = vunpack.c.l.b16 %v270
    %v814 = vunpack.c.h.b16 %v270
    %v815 = vunpack.c.l.b16 %v271
    %v816 = vunpack.c.h.b16 %v271
    %v817 = vunpack.c.l.b16 %v272
    %v818 = vunpack.c.h.b16 %v272
    %v819 = vunpack.c.l.b16 %v273
    %v820 = vunpack.c.h.b16 %v273
    %v821 = vunpack.c.l.b16 %v274
    %v822 = vunpack.c.h.b16 %v274
    %v823 = vunpack.c.l.b16 %v275
    %v824 = vunpack.c.h.b16 %v275
    %v825 = vunpack.c.l.b16 %v276
    %v826 = vunpack.c.h.b16 %v276
    %v827 = vunpack.c.l.b16 %v277
    %v828 = vunpack.c.h.b16 %v277
    %v829 = vunpack.c.l.b16 %v278
    %v830 = vunpack.c.h.b16 %v278
    %v831 = vunpack.c.l.b16 %v279
    %v832 = vunpack.c.h.b16 %v279
    %v833 = vunpack.c.l.b16 %v280
    %v834 = vunpack.c.h.b16 %v280
    %v835 = vunpack.c.l.b16 %v281
    %v836 = vunpack.c.h.b16 %v281
    %v837 = vunpack.c.l.b16 %v282
    %v838 = vunpack.c.h.b16 %v282
    %v839 = vunpack.c.l.b16 %v283
    %v840 = vunpack.c.h.b16 %v283
    %v841 = vunpack.c.l.b16 %v284
    %v842 = vunpack.c.h.b16 %v284
    %v843 = vunpack.c.l.b16 %v285
    %v844 = vunpack.c.h.b16 %v285
    %v845 = vunpack.c.l.b16 %v286
    %v846 = vunpack.c.h.b16 %v286
    %v847 = vunpack.c.l.b16 %v287
    %v848 = vunpack.c.h.b16 %v287
    %v849 = vunpack.c.l.b16 %v288
    %v850 = vunpack.c.h.b16 %v288
    %v851 = vunpack.c.l.b16 %v289
    %v852 = vunpack.c.h.b16 %v289
    %v853 = vunpack.c.l.b16 %v290
    %v854 = vunpack.c.h.b16 %v290
    %v855 = vunpack.c.l.b16 %v291
    %v856 = vunpack.c.h.b16 %v291
    %v857 = vunpack.c.l.b16 %v292
    %v858 = vunpack.c.h.b16 %v292
    %v859 = vunpack.c.l.b16 %v293
    %v860 = vunpack.c.h.b16 %v293
    %v861 = vunpack.c.l.b16 %v294
    %v862 = vunpack.c.h.b16 %v294
    %v863 = vunpack.c.l.b16 %v295
    %v864 = vunpack.c.h.b16 %v295
    %v865 = vunpack.c.l.b16 %v296
    %v866 = vunpack.c.h.b16 %v296
    %v867 = vunpack.c.l.b16 %v297
    %v868 = vunpack.c.h.b16 %v297
    %v869 = vunpack.c.l.b16 %v298
    %v870 = vunpack.c.h.b16 %v298
    %v871 = vunpack.c.l.b16 %v299
    %v872 = vunpack.c.h.b16 %v299
    %v873 = vunpack.c.l.b16 %v300
    %v874 = vunpack.c.h.b16 %v300
    %v875 = vunpack.c.l.b16 %v301
    %v876 = vunpack.c.h.b16 %v301
    %v877 = vunpack.c.l.b16 %v302
    %v878 = vunpack.c.h.b16 %v302
    %v879 = vunpack.c.l.b16 %v303
    %v880 = vunpack.c.h.b16 %v303
    %v881 = vunpack.c.l.b16 %v304
    %v882 = vunpack.c.h.b16 %v304
    %v883 = vunpack.c.l.b16 %v305
    %v884 = vunpack.c.h.b16 %v305
    %v885 = vunpack.c.l.b16 %v306
    %v886 = vunpack.c.h.b16 %v306
    %v887 = vunpack.c.l.b16 %v307
    %v888 = vunpack.c.h.b16 %v307
    %v889 = vunpack.c.l.b16 %v308
    %v890 = vunpack.c.h.b16 %v308
    %v891 = vunpack.c.l.b16 %v309
    %v892 = vunpack.c.h.b16 %v309
    %v893 = vunpack.c.l.b16 %v310
    %v894 = vunpack.c.h.b16 %v310
    %v895 = vunpack.c.l.b16 %v311
    %v896 = vunpack.c.h.b16 %v311
    %v897 = vunpack.c.l.b16 %v312
    %v898 = vunpack.c.h.b16 %v312
    %v899 = vunpack.c.l.b16 %v313
    %v900 = vunpack.c.h.b16 %v313
    %v901 = vunpack.c.l.b16 %v314
    %v902 = vunpack.c.h.b16 %v314
    %v903 = vunpack.c.l.b16 %v315
    %v904 = vunpack.c.h.b16 %v315
    %v905 = vunpack.c.l.b16 %v316
    %v906 = vunpack.c.h.b16 %v316
    %v907 = vunpack.c.l.b16 %v317
    %v908 = vunpack.c.h.b16 %v317
    %v909 = vunpack.c.l.b16 %v318
    %v910 = vunpack.c.h.b16 %v318
    %v911 = vunpack.c.l.b16 %v319
    %v912 = vunpack.c.h.b16 %v319
    %v913 = vunpack.c.l.b16 %v320
    %v914 = vunpack.c.h.b16 %v320
    %v915 = vunpack.c.l.b16 %v321
    %v916 = vunpack.c.h.b16 %v321
    %v917 = vunpack.c.l.b16 %v322
    %v918 = vunpack.c.h.b16 %v322
    %v919 = vunpack.c.l.b16 %v323
    %v920 = vunpack.c.h.b16 %v323
    %v921 = vunpack.c.l.b16 %v324
    %v922 = vunpack.c.h.b16 %v324
    %v923 = vunpack.c.l.b16 %v325
    %v924 = vunpack.c.h.b16 %v325
    %v925 = vunpack.c.l.b16 %v326
    %v926 = vunpack.c.h.b16 %v326
    %v927 = vunpack.c.l.b16 %v327
    %v928 = vunpack.c.h.b16 %v327
    %v929 = vunpack.c.l.b16 %v328
    %v930 = vunpack.c.h.b16 %v328
    %v931 = vunpack.c.l.b16 %v329
    %v932 = vunpack.c.h.b16 %v329
    %v933 = vunpack.c.l.b16 %v330
    %v934 = vunpack.c.h.b16 %v330
    %v935 = vunpack.c.l.b16 %v331
    %v936 = vunpack.c.h.b16 %v331
    %v937 = vunpack.c.l.b16 %v332
    %v938 = vunpack.c.h.b16 %v332
    %v939 = vunpack.c.l.b16 %v333
    %v940 = vunpack.c.h.b16 %v333
    %v941 = vunpack.c.l.b16 %v334
    %v942 = vunpack.c.h.b16 %v334
    %v943 = vunpack.c.l.b16 %v335
    %v944 = vunpack.c.h.b16 %v335
    %v945 = vunpack.c.l.b16 %v336
    %v946 = vunpack.c.h.b16 %v336
    %v947 = vunpack.c.l.b16 %v337
    %v948 = vunpack.c.h.b16 %v337
    %v949 = vunpack.c.l.b16 %v338
    %v950 = vunpack.c.h.b16 %v338
    %v951 = vunpack.c.l.b16 %v339
    %v952 = vunpack.c.h.b16 %v339
    %v953 = vunpack.c.l.b16 %v340
    %v954 = vunpack.c.h.b16 %v340
    %v955 = vunpack.c.l.b16 %v341
    %v956 = vunpack.c.h.b16 %v341
    %v957 = vunpack.c.l.b16 %v342
    %v958 = vunpack.c.h.b16 %v342
    %v959 = vunpack.c.l.b16 %v343
    %v960 = vunpack.c.h.b16 %v343
    %v961 = vunpack.c.l.b16 %v344
    %v962 = vunpack.c.h.b16 %v344
    %v963 = vunpack.c.l.b16 %v345
    %v964 = vunpack.c.h.b16 %v345
    %v965 = vunpack.c.l.b16 %v346
    %v966 = vunpack.c.h.b16 %v346
    %v967 = vunpack.c.l.b16 %v347
    %v968 = vunpack.c.h.b16 %v347
    %v969 = vunpack.c.l.b16 %v348
    %v970 = vunpack.c.h.b16 %v348
    %v971 = vunpack.c.l.b16 %v349
    %v972 = vunpack.c.h.b16 %v349
    %v973 = vunpack.c.l.b16 %v350
    %v974 = vunpack.c.h.b16 %v350
    %v975 = vunpack.c.l.b16 %v351
    %v976 = vunpack.c.h.b16 %v351
    %v977 = vunpack.c.l.b16 %v352
    %v978 = vunpack.c.h.b16 %v352
    %v979 = vunpack.c.l.b16 %v353
    %v980 = vunpack.c.h.b16 %v353
    %v981 = vunpack.c.l.b16 %v354
    %v982 = vunpack.c.h.b16 %v354
    %v983 = vunpack.c.l.b16 %v355
    %v984 = vunpack.c.h.b16 %v355
    %v985 = vunpack.c.l.b16 %v356
    %v986 = vunpack.c.h.b16 %v356
    %v987 = vunpack.c.l.b16 %v357
    %v988 = vunpack.c.h.b16 %v357
    %v989 = vunpack.c.l.b16 %v358
    %v990 = vunpack.c.h.b16 %v358
    %v991 = vunpack.c.l.b16 %v359
    %v992 = vunpack.c.h.b16 %v359
    %v993 = vunpack.c.l.b16 %v360
    %v994 = vunpack.c.h.b16 %v360
    %v995 = vunpack.c.l.b16 %v361
    %v996 = vunpack.c.h.b16 %v361
    %v997 = vunpack.c.l.b16 %v362
    %v998 = vunpack.c.h.b16 %v362
    %v999 = vunpack.c.l.b16 %v363
    %v1000 = vunpack.c.h.b16 %v363
    %v1001 = vpack.c.b16 %v621, %v617
    %v1002 = vpack.c.b16 %v622, %v618
    %v1003 = vpack.c.b16 %v623, %v619
    %v1004 = vpack.c.b16 %v624, %v620
    %v1005 = vpack.c.b16 %v629, %v625
    %v1006 = vpack.c.b16 %v630, %v626
    %v1007 = vpack.c.b16 %v631, %v627
    %v1008 = vpack.c.b16 %v632, %v628
    %v1009 = vpack.c.b16 %v637, %v633
    %v1010 = vpack.c.b16 %v638, %v634
    %v1011 = vpack.c.b16 %v639, %v635
    %v1012 = vpack.c.b16 %v640, %v636
    %v1013 = vpack.c.b16 %v645, %v641
    %v1014 = vpack.c.b16 %v646, %v642
    %v1015 = vpack.c.b16 %v647, %v643
    %v1016 = vpack.c.b16 %v648, %v644
    %v1017 = vpack.c.b16 %v653, %v649
    %v1018 = vpack.c.b16 %v654, %v650
    %v1019 = vpack.c.b16 %v655, %v651
    %v1020 = vpack.c.b16 %v656, %v652
    %v1021 = vpack.c.b16 %v661, %v657
    %v1022 = vpack.c.b16 %v662, %v658
    %v1023 = vpack.c.b16 %v663, %v659
    %v1024 = vpack.c.b16 %v664, %v660
    %v1025 = vpack.c.b16 %v669, %v665
    %v1026 = vpack.c.b16 %v670, %v666
    %v1027 = vpack.c.b16 %v671, %v667
    %v1028 = vpack.c.b16 %v672, %v668
    %v1029 = vpack.c.b16 %v677, %v673
    %v1030 = vpack.c.b16 %v678, %v674
    %v1031 = vpack.c.b16 %v679, %v675
    %v1032 = vpack.c.b16 %v680, %v676
    %v1033 = vpack.c.b16 %v685, %v681
    %v1034 = vpack.c.b16 %v686, %v682
    %v1035 = vpack.c.b16 %v687, %v683
    %v1036 = vpack.c.b16 %v688, %v684
    %v1037 = vpack.c.b16 %v693, %v689
    %v1038 = vpack.c.b16 %v694, %v690
    %v1039 = vpack.c.b16 %v695, %v691
    %v1040 = vpack.c.b16 %v696, %v692
    %v1041 = vpack.c.b16 %v701, %v697
    %v1042 = vpack.c.b16 %v702, %v698
    %v1043 = vpack.c.b16 %v703, %v699
    %v1044 = vpack.c.b16 %v704, %v700
    %v1045 = vpack.c.b16 %v709, %v705
    %v1046 = vpack.c.b16 %v710, %v706
    %v1047 = vpack.c.b16 %v711, %v707
    %v1048 = vpack.c.b16 %v712, %v708
    %v1049 = vpack.c.b16 %v717, %v713
    %v1050 = vpack.c.b16 %v718, %v714
    %v1051 = vpack.c.b16 %v719, %v715
    %v1052 = vpack.c.b16 %v720, %v716
    %v1053 = vpack.c.b16 %v725, %v721
    %v1054 = vpack.c.b16 %v726, %v722
    %v1055 = vpack.c.b16 %v727, %v723
    %v1056 = vpack.c.b16 %v728, %v724
    %v1057 = vpack.c.b16 %v733, %v729
    %v1058 = vpack.c.b16 %v734, %v730
    %v1059 = vpack.c.b16 %v735, %v731
    %v1060 = vpack.c.b16 %v736, %v732
    %v1061 = vpack.c.b16 %v741, %v737
    %v1062 = vpack.c.b16 %v742, %v738
    %v1063 = vpack.c.b16 %v743, %v739
    %v1064 = vpack.c.b16 %v744, %v740
    %v1065 = vpack.c.b16 %v749, %v745
    %v1066 = vpack.c.b16 %v750, %v746
    %v1067 = vpack.c.b16 %v751, %v747
    %v1068 = vpack.c.b16 %v752, %v748
    %v1069 = vpack.c.b16 %v757, %v753
    %v1070 = vpack.c.b16 %v758, %v754
    %v1071 = vpack.c.b16 %v759, %v755
    %v1072 = vpack.c.b16 %v760, %v756
    %v1073 = vpack.c.b16 %v765, %v761
    %v1074 = vpack.c.b16 %v766, %v762
    %v1075 = vpack.c.b16 %v767, %v763
    %v1076 = vpack.c.b16 %v768, %v764
    %v1077 = vpack.c.b16 %v773, %v769
    %v1078 = vpack.c.b16 %v774, %v770
    %v1079 = vpack.c.b16 %v775, %v771
    %v1080 = vpack.c.b16 %v776, %v772
    %v1081 = vpack.c.b16 %v781, %v777
    %v1082 = vpack.c.b16 %v782, %v778
    %v1083 = vpack.c.b16 %v783, %v779
    %v1084 = vpack.c.b16 %v784, %v780
    %v1085 = vpack.c.b16 %v789, %v785
    %v1086 = vpack.c.b16 %v790, %v786
    %v1087 = vpack.c.b16 %v791, %v787
    %v1088 = vpack.c.b16 %v792, %v788
    %v1089 = vpack.c.b16 %v797, %v793
    %v1090 = vpack.c.b16 %v798, %v794
    %v1091 = vpack.c.b16 %v799, %v795
    %v1092 = vpack.c.b16 %v800, %v796
    %v1093 = vpack.c.b16 %v805, %v801
    %v1094 = vpack.c.b16 %v806, %v802
    %v1095 = vpack.c.b16 %v807, %v803
    %v1096 = vpack.c.b16 %v808, %v804
    %v1097 = vpack.c.b16 %v813, %v809
    %v1098 = vpack.c.b16 %v814, %v810
    %v1099 = vpack.c.b16 %v815, %v811
    %v1100 = vpack.c.b16 %v816, %v812
    %v1101 = vpack.c.b16 %v821, %v817
    %v1102 = vpack.c.b16 %v822, %v818
    %v1103 = vpack.c.b16 %v823, %v819
    %v1104 = vpack.c.b16 %v824, %v820
    %v1105 = vpack.c.b16 %v829, %v825
    %v1106 = vpack.c.b16 %v830, %v826
    %v1107 = vpack.c.b16 %v831, %v827
    %v1108 = vpack.c.b16 %v832, %v828
    %v1109 = vpack.c.b16 %v837, %v833
    %v1110 = vpack.c.b16 %v838, %v834
    %v1111 = vpack.c.b16 %v839, %v835
    %v1112 = vpack.c.b16 %v840, %v836
    %v1113 = vpack.c.b16 %v845, %v841
    %v1114 = vpack.c.b16 %v846, %v842
    %v1115 = vpack.c.b16 %v847, %v843
    %v1116 = vpack.c.b16 %v848, %v844
    %v1117 = vpack.c.b16 %v853, %v849
    %v1118 = vpack.c.b16 %v854, %v850
    %v1119 = vpack.c.b16 %v855, %v851
    %v1120 = vpack.c.b16 %v856, %v852
    %v1121 = vpack.c.b16 %v861, %v857
    %v1122 = vpack.c.b16 %v862, %v858
    %v1123 = vpack.c.b16 %v863, %v859
    %v1124 = vpack.c.b16 %v864, %v860
    %v1125 = vpack.c.b16 %v869, %v865
    %v1126 = vpack.c.b16 %v870, %v866
    %v1127 = vpack.c.b16 %v871, %v867
    %v1128 = vpack.c.b16 %v872, %v868
    %v1129 = vpack.c.b16 %v877, %v873
    %v1130 = vpack.c.b16 %v878, %v874
    %v1131 = vpack.c.b16 %v879, %v875
    %v1132 = vpack.c.b16 %v880, %v876
    %v1133 = vpack.c.b16 %v885, %v881
    %v1134 = vpack.c.b16 %v886, %v882
    %v1135 = vpack.c.b16 %v887, %v883
    %v1136 = vpack.c.b16 %v888, %v884
    %v1137 = vpack.c.b16 %v893, %v889
    %v1138 = vpack.c.b16 %v894, %v890
    %v1139 = vpack.c.b16 %v895, %v891
    %v1140 = vpack.c.b16 %v896, %v892
    %v1141 = vpack.c.b16 %v901, %v897
    %v1142 = vpack.c.b16 %v902, %v898
    %v1143 = vpack.c.b16 %v903, %v899
    %v1144 = vpack.c.b16 %v904, %v900
    %v1145 = vpack.c.b16 %v909, %v905
    %v1146 = vpack.c.b16 %v910, %v906
    %v1147 = vpack.c.b16 %v911, %v907
    %v1148 = vpack.c.b16 %v912, %v908
    %v1149 = vpack.c.b16 %v917, %v913
    %v1150 = vpack.c.b16 %v918, %v914
    %v1151 = vpack.c.b16 %v919, %v915
    %v1152 = vpack.c.b16 %v920, %v916
    %v1153 = vpack.c.b16 %v925, %v921
    %v1154 = vpack.c.b16 %v926, %v922
    %v1155 = vpack.c.b16 %v927, %v923
    %v1156 = vpack.c.b16 %v928, %v924
    %v1157 = vpack.c.b16 %v933, %v929
    %v1158 = vpack.c.b16 %v934, %v930
    %v1159 = vpack.c.b16 %v935, %v931
    %v1160 = vpack.c.b16 %v936, %v932
    %v1161 = vpack.c.b16 %v941, %v937
    %v1162 = vpack.c.b16 %v942, %v938
    %v1163 = vpack.c.b16 %v943, %v939
    %v1164 = vpack.c.b16 %v944, %v940
    %v1165 = vpack.c.b16 %v949, %v945
    %v1166 = vpack.c.b16 %v950, %v946
    %v1167 = vpack.c.b16 %v951, %v947
    %v1168 = vpack.c.b16 %v952, %v948
    %v1169 = vpack.c.b16 %v957, %v953
    %v1170 = vpack.c.b16 %v958, %v954
    %v1171 = vpack.c.b16 %v959, %v955
    %v1172 = vpack.c.b16 %v960, %v956
    %v1173 = vpack.c.b16 %v965, %v961
    %v1174 = vpack.c.b16 %v966, %v962
    %v1175 = vpack.c.b16 %v967, %v963
    %v1176 = vpack.c.b16 %v968, %v964
    %v1177 = vpack.c.b16 %v973, %v969
    %v1178 = vpack.c.b16 %v974, %v970
    %v1179 = vpack.c.b16 %v975, %v971
    %v1180 = vpack.c.b16 %v976, %v972
    %v1181 = vpack.c.b16 %v981, %v977
    %v1182 = vpack.c.b16 %v982, %v978
    %v1183 = vpack.c.b16 %v983, %v979
    %v1184 = vpack.c.b16 %v984, %v980
    %v1185 = vpack.c.b16 %v989, %v985
    %v1186 = vpack.c.b16 %v990, %v986
    %v1187 = vpack.c.b16 %v991, %v987
    %v1188 = vpack.c.b16 %v992, %v988
    %v1189 = vpack.c.b16 %v997, %v993
    %v1190 = vpack.c.b16 %v998, %v994
    %v1191 = vpack.c.b16 %v999, %v995
    %v1192 = vpack.c.b16 %v1000, %v996
    %1385 = vmatprep.subr.bf16.mxu0 %v1030
    %1386 = vmatpush1.bf16.msra.mxu0 %v1029
    %1387 = vmatprep.subr.bf16.mxu0 %v1026
    %1388 = vmatpush1.bf16.msra.mxu0 %v1025
    %1389 = vmatprep.subr.bf16.mxu0 %v1022
    %1390 = vmatpush1.bf16.msra.mxu0 %v1021
    %1391 = vmatprep.subr.bf16.mxu0 %v1018
    %1392 = vmatpush1.bf16.msra.mxu0 %v1017
    %1393 = vmatprep.subr.bf16.mxu0 %v1014
    %1394 = vmatpush1.bf16.msra.mxu0 %v1013
    %1395 = vmatprep.subr.bf16.mxu0 %v1010
    %1396 = vmatpush1.bf16.msra.mxu0 %v1009
    %1397 = vmatprep.subr.bf16.mxu0 %v1006
    %1398 = vmatpush1.bf16.msra.mxu0 %v1005
    %1399 = vmatprep.subr.bf16.mxu0 %v1002
    %1400 = vmatpush1.bf16.msra.mxu0 %v1001
    %1401 = vmatprep.subr.bf16.mxu0 %v1062
    %1402 = vmatpush2.bf16.msra.mxu0 %v1061
    %1403 = vmatprep.subr.bf16.mxu0 %v1058
    %1404 = vmatpush2.bf16.msra.mxu0 %v1057
    %1405 = vmatprep.subr.bf16.mxu0 %v1054
    %1406 = vmatpush2.bf16.msra.mxu0 %v1053
    %1407 = vmatprep.subr.bf16.mxu0 %v1050
    %1408 = vmatpush2.bf16.msra.mxu0 %v1049
    %1409 = vmatprep.subr.bf16.mxu0 %v1046
    %1410 = vmatpush2.bf16.msra.mxu0 %v1045
    %1411 = vmatprep.subr.bf16.mxu0 %v1042
    %1412 = vmatpush2.bf16.msra.mxu0 %v1041
    %1413 = vmatprep.subr.bf16.mxu0 %v1038
    %1414 = vmatpush2.bf16.msra.mxu0 %v1037
    %1415 = vmatprep.subr.bf16.mxu0 %v1034
    %1416 = vmatpush2.bf16.msra.mxu0 %v1033
    %1417 = vmatprep.mubr.bf16.mxu0 %v399
    %1418 = vmatmul.mubr.bf16.gmra.mxu0 %v398
    %v1419 = vpop.f32.mrf.mxu0
    %v1420 = vadd.f32 %v408, %v1419
    %v1421 = vpop.f32.mrf.mxu0
    %v1422 = vadd.f32 %v412, %v1421
    %v1423 = vpop.f32.mrf.mxu0
    %v1424 = vpop.f32.mrf.mxu0
    %1425 = vdwg.mxu0
    %1426 = vmatprep.subr.bf16.mxu0 %v1094
    %1427 = vmatpush1.bf16.msra.mxu0 %v1093
    %1428 = vmatprep.subr.bf16.mxu0 %v1090
    %1429 = vmatpush1.bf16.msra.mxu0 %v1089
    %1430 = vmatprep.subr.bf16.mxu0 %v1086
    %1431 = vmatpush1.bf16.msra.mxu0 %v1085
    %1432 = vmatprep.subr.bf16.mxu0 %v1082
    %1433 = vmatpush1.bf16.msra.mxu0 %v1081
    %1434 = vmatprep.subr.bf16.mxu0 %v1078
    %1435 = vmatpush1.bf16.msra.mxu0 %v1077
    %1436 = vmatprep.subr.bf16.mxu0 %v1074
    %1437 = vmatpush1.bf16.msra.mxu0 %v1073
    %1438 = vmatprep.subr.bf16.mxu0 %v1070
    %1439 = vmatpush1.bf16.msra.mxu0 %v1069
    %1440 = vmatprep.subr.bf16.mxu0 %v1066
    %1441 = vmatpush1.bf16.msra.mxu0 %v1065
    %1442 = vmatprep.subr.bf16.mxu0 %v1126
    %1443 = vmatpush2.bf16.msra.mxu0 %v1125
    %1444 = vmatprep.subr.bf16.mxu0 %v1122
    %1445 = vmatpush2.bf16.msra.mxu0 %v1121
    %1446 = vmatprep.subr.bf16.mxu0 %v1118
    %1447 = vmatpush2.bf16.msra.mxu0 %v1117
    %1448 = vmatprep.subr.bf16.mxu0 %v1114
    %1449 = vmatpush2.bf16.msra.mxu0 %v1113
    %1450 = vmatprep.subr.bf16.mxu0 %v1110
    %1451 = vmatpush2.bf16.msra.mxu0 %v1109
    %1452 = vmatprep.subr.bf16.mxu0 %v1106
    %1453 = vmatpush2.bf16.msra.mxu0 %v1105
    %1454 = vmatprep.subr.bf16.mxu0 %v1102
    %1455 = vmatpush2.bf16.msra.mxu0 %v1101
    %1456 = vmatprep.subr.bf16.mxu0 %v1098
    %1457 = vmatpush2.bf16.msra.mxu0 %v1097
    %1458 = vmatprep.mubr.bf16.mxu0 %v401
    %1459 = vmatmul.mubr.bf16.gmra.mxu0 %v400
    %v1460 = vpop.f32.mrf.mxu0
    %v1461 = vadd.f32 %v1420, %v1460
    %v1462 = vpop.f32.mrf.mxu0
    %v1463 = vadd.f32 %v1422, %v1462
    %v1464 = vpop.f32.mrf.mxu0
    %v1465 = vpop.f32.mrf.mxu0
    %1466 = vdwg.mxu0
    %1467 = vmatprep.subr.bf16.mxu0 %v1158
    %1468 = vmatpush1.bf16.msra.mxu0 %v1157
    %1469 = vmatprep.subr.bf16.mxu0 %v1154
    %1470 = vmatpush1.bf16.msra.mxu0 %v1153
    %1471 = vmatprep.subr.bf16.mxu0 %v1150
    %1472 = vmatpush1.bf16.msra.mxu0 %v1149
    %1473 = vmatprep.subr.bf16.mxu0 %v1146
    %1474 = vmatpush1.bf16.msra.mxu0 %v1145
    %1475 = vmatprep.subr.bf16.mxu0 %v1142
    %1476 = vmatpush1.bf16.msra.mxu0 %v1141
    %1477 = vmatprep.subr.bf16.mxu0 %v1138
    %1478 = vmatpush1.bf16.msra.mxu0 %v1137
    %1479 = vmatprep.subr.bf16.mxu0 %v1134
    %1480 = vmatpush1.bf16.msra.mxu0 %v1133
    %1481 = vmatprep.subr.bf16.mxu0 %v1130
    %1482 = vmatpush1.bf16.msra.mxu0 %v1129
    %1483 = vmatprep.subr.bf16.mxu0 %v1190
    %1484 = vmatpush2.bf16.msra.mxu0 %v1189
    %1485 = vmatprep.subr.bf16.mxu0 %v1186
    %1486 = vmatpush2.bf16.msra.mxu0 %v1185
    %1487 = vmatprep.subr.bf16.mxu0 %v1182
    %1488 = vmatpush2.bf16.msra.mxu0 %v1181
    %1489 = vmatprep.subr.bf16.mxu0 %v1178
    %1490 = vmatpush2.bf16.msra.mxu0 %v1177
    %1491 = vmatprep.subr.bf16.mxu0 %v1174
    %1492 = vmatpush2.bf16.msra.mxu0 %v1173
    %1493 = vmatprep.subr.bf16.mxu0 %v1170
    %1494 = vmatpush2.bf16.msra.mxu0 %v1169
    %1495 = vmatprep.subr.bf16.mxu0 %v1166
    %1496 = vmatpush2.bf16.msra.mxu0 %v1165
    %1497 = vmatprep.subr.bf16.mxu0 %v1162
    %1498 = vmatpush2.bf16.msra.mxu0 %v1161
    %1499 = vmatprep.mubr.bf16.mxu0 %v403
    %1500 = vmatmul.mubr.bf16.gmra.mxu0 %v402
    %v1501 = vpop.f32.mrf.mxu0
    %v1502 = vadd.f32 %v1461, %v1501
    %v1503 = vpop.f32.mrf.mxu0
    %v1504 = vadd.f32 %v1463, %v1503
    %v1505 = vpop.f32.mrf.mxu0
    %v1506 = vpop.f32.mrf.mxu0
    %1507 = vdwg.mxu0
    %1508 = vmatprep.subr.bf16.mxu0 %v1032
    %1509 = vmatpush1.bf16.msra.mxu0 %v1031
    %1510 = vmatprep.subr.bf16.mxu0 %v1028
    %1511 = vmatpush1.bf16.msra.mxu0 %v1027
    %1512 = vmatprep.subr.bf16.mxu0 %v1024
    %1513 = vmatpush1.bf16.msra.mxu0 %v1023
    %1514 = vmatprep.subr.bf16.mxu0 %v1020
    %1515 = vmatpush1.bf16.msra.mxu0 %v1019
    %1516 = vmatprep.subr.bf16.mxu0 %v1016
    %1517 = vmatpush1.bf16.msra.mxu0 %v1015
    %1518 = vmatprep.subr.bf16.mxu0 %v1012
    %1519 = vmatpush1.bf16.msra.mxu0 %v1011
    %1520 = vmatprep.subr.bf16.mxu0 %v1008
    %1521 = vmatpush1.bf16.msra.mxu0 %v1007
    %1522 = vmatprep.subr.bf16.mxu0 %v1004
    %1523 = vmatpush1.bf16.msra.mxu0 %v1003
    %1524 = vmatprep.subr.bf16.mxu0 %v1064
    %1525 = vmatpush2.bf16.msra.mxu0 %v1063
    %1526 = vmatprep.subr.bf16.mxu0 %v1060
    %1527 = vmatpush2.bf16.msra.mxu0 %v1059
    %1528 = vmatprep.subr.bf16.mxu0 %v1056
    %1529 = vmatpush2.bf16.msra.mxu0 %v1055
    %1530 = vmatprep.subr.bf16.mxu0 %v1052
    %1531 = vmatpush2.bf16.msra.mxu0 %v1051
    %1532 = vmatprep.subr.bf16.mxu0 %v1048
    %1533 = vmatpush2.bf16.msra.mxu0 %v1047
    %1534 = vmatprep.subr.bf16.mxu0 %v1044
    %1535 = vmatpush2.bf16.msra.mxu0 %v1043
    %1536 = vmatprep.subr.bf16.mxu0 %v1040
    %1537 = vmatpush2.bf16.msra.mxu0 %v1039
    %1538 = vmatprep.subr.bf16.mxu0 %v1036
    %1539 = vmatpush2.bf16.msra.mxu0 %v1035
    %1540 = vmatprep.mubr.bf16.mxu0 %v399
    %1541 = vmatmul.mubr.bf16.gmra.mxu0 %v398
    %v1542 = vpop.f32.mrf.mxu0
    %v1543 = vadd.f32 %v416, %v1542
    %v1544 = vpop.f32.mrf.mxu0
    %v1545 = vadd.f32 %v420, %v1544
    %v1546 = vpop.f32.mrf.mxu0
    %v1547 = vpop.f32.mrf.mxu0
    %1548 = vdwg.mxu0
    %1549 = vmatprep.subr.bf16.mxu0 %v1096
    %1550 = vmatpush1.bf16.msra.mxu0 %v1095
    %1551 = vmatprep.subr.bf16.mxu0 %v1092
    %1552 = vmatpush1.bf16.msra.mxu0 %v1091
    %1553 = vmatprep.subr.bf16.mxu0 %v1088
    %1554 = vmatpush1.bf16.msra.mxu0 %v1087
    %1555 = vmatprep.subr.bf16.mxu0 %v1084
    %1556 = vmatpush1.bf16.msra.mxu0 %v1083
    %1557 = vmatprep.subr.bf16.mxu0 %v1080
    %1558 = vmatpush1.bf16.msra.mxu0 %v1079
    %1559 = vmatprep.subr.bf16.mxu0 %v1076
    %1560 = vmatpush1.bf16.msra.mxu0 %v1075
    %1561 = vmatprep.subr.bf16.mxu0 %v1072
    %1562 = vmatpush1.bf16.msra.mxu0 %v1071
    %1563 = vmatprep.subr.bf16.mxu0 %v1068
    %1564 = vmatpush1.bf16.msra.mxu0 %v1067
    %1565 = vmatprep.subr.bf16.mxu0 %v1128
    %1566 = vmatpush2.bf16.msra.mxu0 %v1127
    %1567 = vmatprep.subr.bf16.mxu0 %v1124
    %1568 = vmatpush2.bf16.msra.mxu0 %v1123
    %1569 = vmatprep.subr.bf16.mxu0 %v1120
    %1570 = vmatpush2.bf16.msra.mxu0 %v1119
    %1571 = vmatprep.subr.bf16.mxu0 %v1116
    %1572 = vmatpush2.bf16.msra.mxu0 %v1115
    %1573 = vmatprep.subr.bf16.mxu0 %v1112
    %1574 = vmatpush2.bf16.msra.mxu0 %v1111
    %1575 = vmatprep.subr.bf16.mxu0 %v1108
    %1576 = vmatpush2.bf16.msra.mxu0 %v1107
    %1577 = vmatprep.subr.bf16.mxu0 %v1104
    %1578 = vmatpush2.bf16.msra.mxu0 %v1103
    %1579 = vmatprep.subr.bf16.mxu0 %v1100
    %1580 = vmatpush2.bf16.msra.mxu0 %v1099
    %1581 = vmatprep.mubr.bf16.mxu0 %v401
    %1582 = vmatmul.mubr.bf16.gmra.mxu0 %v400
    %v1583 = vpop.f32.mrf.mxu0
    %v1584 = vadd.f32 %v1543, %v1583
    %v1585 = vpop.f32.mrf.mxu0
    %v1586 = vadd.f32 %v1545, %v1585
    %v1587 = vpop.f32.mrf.mxu0
    %v1588 = vpop.f32.mrf.mxu0
    %1589 = vdwg.mxu0
    %1590 = vmatprep.subr.bf16.mxu0 %v1160
    %1591 = vmatpush1.bf16.msra.mxu0 %v1159
    %1592 = vmatprep.subr.bf16.mxu0 %v1156
    %1593 = vmatpush1.bf16.msra.mxu0 %v1155
    %1594 = vmatprep.subr.bf16.mxu0 %v1152
    %1595 = vmatpush1.bf16.msra.mxu0 %v1151
    %1596 = vmatprep.subr.bf16.mxu0 %v1148
    %1597 = vmatpush1.bf16.msra.mxu0 %v1147
    %1598 = vmatprep.subr.bf16.mxu0 %v1144
    %1599 = vmatpush1.bf16.msra.mxu0 %v1143
    %1600 = vmatprep.subr.bf16.mxu0 %v1140
    %1601 = vmatpush1.bf16.msra.mxu0 %v1139
    %1602 = vmatprep.subr.bf16.mxu0 %v1136
    %1603 = vmatpush1.bf16.msra.mxu0 %v1135
    %1604 = vmatprep.subr.bf16.mxu0 %v1132
    %1605 = vmatpush1.bf16.msra.mxu0 %v1131
    %1606 = vmatprep.subr.bf16.mxu0 %v1192
    %1607 = vmatpush2.bf16.msra.mxu0 %v1191
    %1608 = vmatprep.subr.bf16.mxu0 %v1188
    %1609 = vmatpush2.bf16.msra.mxu0 %v1187
    %1610 = vmatprep.subr.bf16.mxu0 %v1184
    %1611 = vmatpush2.bf16.msra.mxu0 %v1183
    %1612 = vmatprep.subr.bf16.mxu0 %v1180
    %1613 = vmatpush2.bf16.msra.mxu0 %v1179
    %1614 = vmatprep.subr.bf16.mxu0 %v1176
    %1615 = vmatpush2.bf16.msra.mxu0 %v1175
    %1616 = vmatprep.subr.bf16.mxu0 %v1172
    %1617 = vmatpush2.bf16.msra.mxu0 %v1171
    %1618 = vmatprep.subr.bf16.mxu0 %v1168
    %1619 = vmatpush2.bf16.msra.mxu0 %v1167
    %1620 = vmatprep.subr.bf16.mxu0 %v1164
    %1621 = vmatpush2.bf16.msra.mxu0 %v1163
    %1622 = vmatprep.mubr.bf16.mxu0 %v403
    %1623 = vmatmul.mubr.bf16.gmra.mxu0 %v402
    %v1624 = vpop.f32.mrf.mxu0
    %v1625 = vadd.f32 %v1584, %v1624
    %v1626 = vpop.f32.mrf.mxu0
    %v1627 = vadd.f32 %v1586, %v1626
    %v1628 = vpop.f32.mrf.mxu0
    %v1629 = vpop.f32.mrf.mxu0
    %1630 = vdwg.mxu0
    %vm1631 = vcmp.gt.f32.partialorder %v1502, 0.0
    %vm1632 = vcmp.gt.f32.partialorder %v1504, 0.0
    %vm1633 = vcmp.gt.f32.partialorder %v1625, 0.0
    %vm1634 = vcmp.gt.f32.partialorder %v1627, 0.0
    %v1635 = vmul.f32 %v1502, 0.2
    %v1636 = vmul.f32 %v1504, 0.2
    %v1637 = vmul.f32 %v1625, 0.2
    %v1638 = vmul.f32 %v1627, 0.2
    %v1639 = vsel %vm1631, %v1502, %v1635
    %v1640 = vsel %vm1632, %v1504, %v1636
    %v1641 = vsel %vm1633, %v1625, %v1637
    %v1642 = vsel %vm1634, %v1627, %v1638
    %v1643 = vld [vmem:[#allocation8] sm:$0xff]
    %v1644 = vld [vmem:[#allocation8 + $0x8] sm:$0xff]
    %v1645 = vld [vmem:[#allocation8 + $0x10] sm:$0xff]
    %v1646 = vld [vmem:[#allocation8 + $0x18] sm:$0xff]
    %v1647 = vld [vmem:[#allocation8 + $0x20] sm:$0xff]
    %v1648 = vld [vmem:[#allocation8 + $0x28] sm:$0xff]
    %v1649 = vld [vmem:[#allocation8 + $0x30] sm:$0xff]
    %v1650 = vld [vmem:[#allocation8 + $0x38] sm:$0xff]
    %v1651 = vld [vmem:[#allocation8 + $0x40] sm:$0xff]
    %v1652 = vld [vmem:[#allocation8 + $0x48] sm:$0xff]
    %v1653 = vld [vmem:[#allocation8 + $0x50] sm:$0xff]
    %v1654 = vld [vmem:[#allocation8 + $0x58] sm:$0xff]
    %v1655 = vld [vmem:[#allocation8 + $0x60] sm:$0xff]
    %v1656 = vld [vmem:[#allocation8 + $0x68] sm:$0xff]
    %v1657 = vld [vmem:[#allocation8 + $0x70] sm:$0xff]
    %v1658 = vld [vmem:[#allocation8 + $0x78] sm:$0xff]
    %v1659 = vld [vmem:[#allocation8 + $0x80] sm:$0xff]
    %v1660 = vld [vmem:[#allocation8 + $0x88] sm:$0xff]
    %v1661 = vld [vmem:[#allocation8 + $0x90] sm:$0xff]
    %v1662 = vld [vmem:[#allocation8 + $0x98] sm:$0xff]
    %v1663 = vld [vmem:[#allocation8 + $0xa0] sm:$0xff]
    %v1664 = vld [vmem:[#allocation8 + $0xa8] sm:$0xff]
    %v1665 = vld [vmem:[#allocation8 + $0xb0] sm:$0xff]
    %v1666 = vld [vmem:[#allocation8 + $0xb8] sm:$0xff]
    %v1667 = vld [vmem:[#allocation8 + $0xc0] sm:$0xff]
    %v1668 = vld [vmem:[#allocation8 + $0xc8] sm:$0xff]
    %v1669 = vld [vmem:[#allocation8 + $0xd0] sm:$0xff]
    %v1670 = vld [vmem:[#allocation8 + $0xd8] sm:$0xff]
    %v1671 = vld [vmem:[#allocation8 + $0xe0] sm:$0xff]
    %v1672 = vld [vmem:[#allocation8 + $0xe8] sm:$0xff]
    %v1673 = vld [vmem:[#allocation8 + $0xf0] sm:$0xff]
    %v1674 = vld [vmem:[#allocation8 + $0xf8] sm:$0xff]
    %v1675 = vld [vmem:[#allocation8 + $0x100] sm:$0xff]
    %v1676 = vld [vmem:[#allocation8 + $0x108] sm:$0xff]
    %v1677 = vld [vmem:[#allocation8 + $0x110] sm:$0xff]
    %v1678 = vld [vmem:[#allocation8 + $0x118] sm:$0xff]
    %v1679 = vld [vmem:[#allocation8 + $0x120] sm:$0xff]
    %v1680 = vld [vmem:[#allocation8 + $0x128] sm:$0xff]
    %v1681 = vld [vmem:[#allocation8 + $0x130] sm:$0xff]
    %v1682 = vld [vmem:[#allocation8 + $0x138] sm:$0xff]
    %v1683 = vld [vmem:[#allocation8 + $0x140] sm:$0xff]
    %v1684 = vld [vmem:[#allocation8 + $0x148] sm:$0xff]
    %v1685 = vld [vmem:[#allocation8 + $0x150] sm:$0xff]
    %v1686 = vld [vmem:[#allocation8 + $0x158] sm:$0xff]
    %v1687 = vld [vmem:[#allocation8 + $0x160] sm:$0xff]
    %v1688 = vld [vmem:[#allocation8 + $0x168] sm:$0xff]
    %v1689 = vld [vmem:[#allocation8 + $0x170] sm:$0xff]
    %v1690 = vld [vmem:[#allocation8 + $0x178] sm:$0xff]
    %v1691 = vld [vmem:[#allocation8 + $0x180] sm:$0xff]
    %v1692 = vld [vmem:[#allocation8 + $0x188] sm:$0xff]
    %v1693 = vld [vmem:[#allocation8 + $0x190] sm:$0xff]
    %v1694 = vld [vmem:[#allocation8 + $0x198] sm:$0xff]
    %v1695 = vld [vmem:[#allocation8 + $0x1a0] sm:$0xff]
    %v1696 = vld [vmem:[#allocation8 + $0x1a8] sm:$0xff]
    %v1697 = vld [vmem:[#allocation8 + $0x1b0] sm:$0xff]
    %v1698 = vld [vmem:[#allocation8 + $0x1b8] sm:$0xff]
    %v1699 = vld [vmem:[#allocation8 + $0x1c0] sm:$0xff]
    %v1700 = vld [vmem:[#allocation8 + $0x1c8] sm:$0xff]
    %v1701 = vld [vmem:[#allocation8 + $0x1d0] sm:$0xff]
    %v1702 = vld [vmem:[#allocation8 + $0x1d8] sm:$0xff]
    %v1703 = vld [vmem:[#allocation8 + $0x1e0] sm:$0xff]
    %v1704 = vld [vmem:[#allocation8 + $0x1e8] sm:$0xff]
    %v1705 = vld [vmem:[#allocation8 + $0x1f0] sm:$0xff]
    %v1706 = vld [vmem:[#allocation8 + $0x1f8] sm:$0xff]
    %v1707 = vld [vmem:[%s4] sm:$0x3]
    %v1708 = vpack.c.bf16 %v1639, %v1639
    %v1709 = vpack.c.bf16 %v1640, %v1640
    %v1710 = vpack.c.bf16 %v1641, %v1641
    %v1711 = vpack.c.bf16 %v1642, %v1642
    %v1713 = vlaneseq
    %v1714 = vshrl.u32 %v1713, 7
    %v1715 = vsub.s32 0, %v1714
    %v1716 = vrot.slane %v1707, %v1715
    %v1717 = vlaneseq
    %v1718 = vshrl.u32 %v1717, 7
    %v1719 = vsub.s32 1, %v1718
    %v1720 = vrot.slane %v1707, %v1719
    %v1787 = vunpack.c.l.b16 %v1643
    %v1788 = vunpack.c.h.b16 %v1643
    %v1789 = vunpack.c.l.b16 %v1644
    %v1790 = vunpack.c.h.b16 %v1644
    %v1791 = vunpack.c.l.b16 %v1645
    %v1792 = vunpack.c.h.b16 %v1645
    %v1793 = vunpack.c.l.b16 %v1646
    %v1794 = vunpack.c.h.b16 %v1646
    %v1795 = vunpack.c.l.b16 %v1647
    %v1796 = vunpack.c.h.b16 %v1647
    %v1797 = vunpack.c.l.b16 %v1648
    %v1798 = vunpack.c.h.b16 %v1648
    %v1799 = vunpack.c.l.b16 %v1649
    %v1800 = vunpack.c.h.b16 %v1649
    %v1801 = vunpack.c.l.b16 %v1650
    %v1802 = vunpack.c.h.b16 %v1650
    %v1803 = vunpack.c.l.b16 %v1651
    %v1804 = vunpack.c.h.b16 %v1651
    %v1805 = vunpack.c.l.b16 %v1652
    %v1806 = vunpack.c.h.b16 %v1652
    %v1807 = vunpack.c.l.b16 %v1653
    %v1808 = vunpack.c.h.b16 %v1653
    %v1809 = vunpack.c.l.b16 %v1654
    %v1810 = vunpack.c.h.b16 %v1654
    %v1811 = vunpack.c.l.b16 %v1655
    %v1812 = vunpack.c.h.b16 %v1655
    %v1813 = vunpack.c.l.b16 %v1656
    %v1814 = vunpack.c.h.b16 %v1656
    %v1815 = vunpack.c.l.b16 %v1657
    %v1816 = vunpack.c.h.b16 %v1657
    %v1817 = vunpack.c.l.b16 %v1658
    %v1818 = vunpack.c.h.b16 %v1658
    %v1819 = vunpack.c.l.b16 %v1659
    %v1820 = vunpack.c.h.b16 %v1659
    %v1821 = vunpack.c.l.b16 %v1660
    %v1822 = vunpack.c.h.b16 %v1660
    %v1823 = vunpack.c.l.b16 %v1661
    %v1824 = vunpack.c.h.b16 %v1661
    %v1825 = vunpack.c.l.b16 %v1662
    %v1826 = vunpack.c.h.b16 %v1662
    %v1827 = vunpack.c.l.b16 %v1663
    %v1828 = vunpack.c.h.b16 %v1663
    %v1829 = vunpack.c.l.b16 %v1664
    %v1830 = vunpack.c.h.b16 %v1664
    %v1831 = vunpack.c.l.b16 %v1665
    %v1832 = vunpack.c.h.b16 %v1665
    %v1833 = vunpack.c.l.b16 %v1666
    %v1834 = vunpack.c.h.b16 %v1666
    %v1835 = vunpack.c.l.b16 %v1667
    %v1836 = vunpack.c.h.b16 %v1667
    %v1837 = vunpack.c.l.b16 %v1668
    %v1838 = vunpack.c.h.b16 %v1668
    %v1839 = vunpack.c.l.b16 %v1669
    %v1840 = vunpack.c.h.b16 %v1669
    %v1841 = vunpack.c.l.b16 %v1670
    %v1842 = vunpack.c.h.b16 %v1670
    %v1843 = vunpack.c.l.b16 %v1671
    %v1844 = vunpack.c.h.b16 %v1671
    %v1845 = vunpack.c.l.b16 %v1672
    %v1846 = vunpack.c.h.b16 %v1672
    %v1847 = vunpack.c.l.b16 %v1673
    %v1848 = vunpack.c.h.b16 %v1673
    %v1849 = vunpack.c.l.b16 %v1674
    %v1850 = vunpack.c.h.b16 %v1674
    %v1851 = vunpack.c.l.b16 %v1675
    %v1852 = vunpack.c.h.b16 %v1675
    %v1853 = vunpack.c.l.b16 %v1676
    %v1854 = vunpack.c.h.b16 %v1676
    %v1855 = vunpack.c.l.b16 %v1677
    %v1856 = vunpack.c.h.b16 %v1677
    %v1857 = vunpack.c.l.b16 %v1678
    %v1858 = vunpack.c.h.b16 %v1678
    %v1859 = vunpack.c.l.b16 %v1679
    %v1860 = vunpack.c.h.b16 %v1679
    %v1861 = vunpack.c.l.b16 %v1680
    %v1862 = vunpack.c.h.b16 %v1680
    %v1863 = vunpack.c.l.b16 %v1681
    %v1864 = vunpack.c.h.b16 %v1681
    %v1865 = vunpack.c.l.b16 %v1682
    %v1866 = vunpack.c.h.b16 %v1682
    %v1867 = vunpack.c.l.b16 %v1683
    %v1868 = vunpack.c.h.b16 %v1683
    %v1869 = vunpack.c.l.b16 %v1684
    %v1870 = vunpack.c.h.b16 %v1684
    %v1871 = vunpack.c.l.b16 %v1685
    %v1872 = vunpack.c.h.b16 %v1685
    %v1873 = vunpack.c.l.b16 %v1686
    %v1874 = vunpack.c.h.b16 %v1686
    %v1875 = vunpack.c.l.b16 %v1687
    %v1876 = vunpack.c.h.b16 %v1687
    %v1877 = vunpack.c.l.b16 %v1688
    %v1878 = vunpack.c.h.b16 %v1688
    %v1879 = vunpack.c.l.b16 %v1689
    %v1880 = vunpack.c.h.b16 %v1689
    %v1881 = vunpack.c.l.b16 %v1690
    %v1882 = vunpack.c.h.b16 %v1690
    %v1883 = vunpack.c.l.b16 %v1691
    %v1884 = vunpack.c.h.b16 %v1691
    %v1885 = vunpack.c.l.b16 %v1692
    %v1886 = vunpack.c.h.b16 %v1692
    %v1887 = vunpack.c.l.b16 %v1693
    %v1888 = vunpack.c.h.b16 %v1693
    %v1889 = vunpack.c.l.b16 %v1694
    %v1890 = vunpack.c.h.b16 %v1694
    %v1891 = vunpack.c.l.b16 %v1695
    %v1892 = vunpack.c.h.b16 %v1695
    %v1893 = vunpack.c.l.b16 %v1696
    %v1894 = vunpack.c.h.b16 %v1696
    %v1895 = vunpack.c.l.b16 %v1697
    %v1896 = vunpack.c.h.b16 %v1697
    %v1897 = vunpack.c.l.b16 %v1698
    %v1898 = vunpack.c.h.b16 %v1698
    %v1899 = vunpack.c.l.b16 %v1699
    %v1900 = vunpack.c.h.b16 %v1699
    %v1901 = vunpack.c.l.b16 %v1700
    %v1902 = vunpack.c.h.b16 %v1700
    %v1903 = vunpack.c.l.b16 %v1701
    %v1904 = vunpack.c.h.b16 %v1701
    %v1905 = vunpack.c.l.b16 %v1702
    %v1906 = vunpack.c.h.b16 %v1702
    %v1907 = vunpack.c.l.b16 %v1703
    %v1908 = vunpack.c.h.b16 %v1703
    %v1909 = vunpack.c.l.b16 %v1704
    %v1910 = vunpack.c.h.b16 %v1704
    %v1911 = vunpack.c.l.b16 %v1705
    %v1912 = vunpack.c.h.b16 %v1705
    %v1913 = vunpack.c.l.b16 %v1706
    %v1914 = vunpack.c.h.b16 %v1706
    %v1915 = vpack.c.b16 %v1789, %v1787
    %v1916 = vpack.c.b16 %v1790, %v1788
    %v1917 = vpack.c.b16 %v1793, %v1791
    %v1918 = vpack.c.b16 %v1794, %v1792
    %v1919 = vpack.c.b16 %v1797, %v1795
    %v1920 = vpack.c.b16 %v1798, %v1796
    %v1921 = vpack.c.b16 %v1801, %v1799
    %v1922 = vpack.c.b16 %v1802, %v1800
    %v1923 = vpack.c.b16 %v1805, %v1803
    %v1924 = vpack.c.b16 %v1806, %v1804
    %v1925 = vpack.c.b16 %v1809, %v1807
    %v1926 = vpack.c.b16 %v1810, %v1808
    %v1927 = vpack.c.b16 %v1813, %v1811
    %v1928 = vpack.c.b16 %v1814, %v1812
    %v1929 = vpack.c.b16 %v1817, %v1815
    %v1930 = vpack.c.b16 %v1818, %v1816
    %v1931 = vpack.c.b16 %v1821, %v1819
    %v1932 = vpack.c.b16 %v1822, %v1820
    %v1933 = vpack.c.b16 %v1825, %v1823
    %v1934 = vpack.c.b16 %v1826, %v1824
    %v1935 = vpack.c.b16 %v1829, %v1827
    %v1936 = vpack.c.b16 %v1830, %v1828
    %v1937 = vpack.c.b16 %v1833, %v1831
    %v1938 = vpack.c.b16 %v1834, %v1832
    %v1939 = vpack.c.b16 %v1837, %v1835
    %v1940 = vpack.c.b16 %v1838, %v1836
    %v1941 = vpack.c.b16 %v1841, %v1839
    %v1942 = vpack.c.b16 %v1842, %v1840
    %v1943 = vpack.c.b16 %v1845, %v1843
    %v1944 = vpack.c.b16 %v1846, %v1844
    %v1945 = vpack.c.b16 %v1849, %v1847
    %v1946 = vpack.c.b16 %v1850, %v1848
    %v1947 = vpack.c.b16 %v1853, %v1851
    %v1948 = vpack.c.b16 %v1854, %v1852
    %v1949 = vpack.c.b16 %v1857, %v1855
    %v1950 = vpack.c.b16 %v1858, %v1856
    %v1951 = vpack.c.b16 %v1861, %v1859
    %v1952 = vpack.c.b16 %v1862, %v1860
    %v1953 = vpack.c.b16 %v1865, %v1863
    %v1954 = vpack.c.b16 %v1866, %v1864
    %v1955 = vpack.c.b16 %v1869, %v1867
    %v1956 = vpack.c.b16 %v1870, %v1868
    %v1957 = vpack.c.b16 %v1873, %v1871
    %v1958 = vpack.c.b16 %v1874, %v1872
    %v1959 = vpack.c.b16 %v1877, %v1875
    %v1960 = vpack.c.b16 %v1878, %v1876
    %v1961 = vpack.c.b16 %v1881, %v1879
    %v1962 = vpack.c.b16 %v1882, %v1880
    %v1963 = vpack.c.b16 %v1885, %v1883
    %v1964 = vpack.c.b16 %v1886, %v1884
    %v1965 = vpack.c.b16 %v1889, %v1887
    %v1966 = vpack.c.b16 %v1890, %v1888
    %v1967 = vpack.c.b16 %v1893, %v1891
    %v1968 = vpack.c.b16 %v1894, %v1892
    %v1969 = vpack.c.b16 %v1897, %v1895
    %v1970 = vpack.c.b16 %v1898, %v1896
    %v1971 = vpack.c.b16 %v1901, %v1899
    %v1972 = vpack.c.b16 %v1902, %v1900
    %v1973 = vpack.c.b16 %v1905, %v1903
    %v1974 = vpack.c.b16 %v1906, %v1904
    %v1975 = vpack.c.b16 %v1909, %v1907
    %v1976 = vpack.c.b16 %v1910, %v1908
    %v1977 = vpack.c.b16 %v1913, %v1911
    %v1978 = vpack.c.b16 %v1914, %v1912
    %2043 = vmatprep.subr.bf16.mxu0 %v1930
    %2044 = vmatpush1.bf16.msra.mxu0 %v1929
    %2045 = vmatprep.subr.bf16.mxu0 %v1928
    %2046 = vmatpush1.bf16.msra.mxu0 %v1927
    %2047 = vmatprep.subr.bf16.mxu0 %v1926
    %2048 = vmatpush1.bf16.msra.mxu0 %v1925
    %2049 = vmatprep.subr.bf16.mxu0 %v1924
    %2050 = vmatpush1.bf16.msra.mxu0 %v1923
    %2051 = vmatprep.subr.bf16.mxu0 %v1922
    %2052 = vmatpush1.bf16.msra.mxu0 %v1921
    %2053 = vmatprep.subr.bf16.mxu0 %v1920
    %2054 = vmatpush1.bf16.msra.mxu0 %v1919
    %2055 = vmatprep.subr.bf16.mxu0 %v1918
    %2056 = vmatpush1.bf16.msra.mxu0 %v1917
    %2057 = vmatprep.subr.bf16.mxu0 %v1916
    %2058 = vmatpush1.bf16.msra.mxu0 %v1915
    %2059 = vmatprep.subr.bf16.mxu0 %v1946
    %2060 = vmatpush2.bf16.msra.mxu0 %v1945
    %2061 = vmatprep.subr.bf16.mxu0 %v1944
    %2062 = vmatpush2.bf16.msra.mxu0 %v1943
    %2063 = vmatprep.subr.bf16.mxu0 %v1942
    %2064 = vmatpush2.bf16.msra.mxu0 %v1941
    %2065 = vmatprep.subr.bf16.mxu0 %v1940
    %2066 = vmatpush2.bf16.msra.mxu0 %v1939
    %2067 = vmatprep.subr.bf16.mxu0 %v1938
    %2068 = vmatpush2.bf16.msra.mxu0 %v1937
    %2069 = vmatprep.subr.bf16.mxu0 %v1936
    %2070 = vmatpush2.bf16.msra.mxu0 %v1935
    %2071 = vmatprep.subr.bf16.mxu0 %v1934
    %2072 = vmatpush2.bf16.msra.mxu0 %v1933
    %2073 = vmatprep.subr.bf16.mxu0 %v1932
    %2074 = vmatpush2.bf16.msra.mxu0 %v1931
    %2075 = vmatprep.mubr.bf16.mxu0 %v1709
    %2076 = vmatmul.mubr.bf16.gmra.mxu0 %v1708
    %v2077 = vpop.f32.mrf.mxu0
    %v2078 = vadd.f32 %v1716, %v2077
    %v2079 = vpop.f32.mrf.mxu0
    %v2080 = vadd.f32 %v1720, %v2079
    %v2081 = vpop.f32.mrf.mxu0
    %v2082 = vpop.f32.mrf.mxu0
    %2083 = vdwg.mxu0
    %2084 = vmatprep.subr.bf16.mxu0 %v1962
    %2085 = vmatpush1.bf16.msra.mxu0 %v1961
    %2086 = vmatprep.subr.bf16.mxu0 %v1960
    %2087 = vmatpush1.bf16.msra.mxu0 %v1959
    %2088 = vmatprep.subr.bf16.mxu0 %v1958
    %2089 = vmatpush1.bf16.msra.mxu0 %v1957
    %2090 = vmatprep.subr.bf16.mxu0 %v1956
    %2091 = vmatpush1.bf16.msra.mxu0 %v1955
    %2092 = vmatprep.subr.bf16.mxu0 %v1954
    %2093 = vmatpush1.bf16.msra.mxu0 %v1953
    %2094 = vmatprep.subr.bf16.mxu0 %v1952
    %2095 = vmatpush1.bf16.msra.mxu0 %v1951
    %2096 = vmatprep.subr.bf16.mxu0 %v1950
    %2097 = vmatpush1.bf16.msra.mxu0 %v1949
    %2098 = vmatprep.subr.bf16.mxu0 %v1948
    %2099 = vmatpush1.bf16.msra.mxu0 %v1947
    %2100 = vmatprep.subr.bf16.mxu0 %v1978
    %2101 = vmatpush2.bf16.msra.mxu0 %v1977
    %2102 = vmatprep.subr.bf16.mxu0 %v1976
    %2103 = vmatpush2.bf16.msra.mxu0 %v1975
    %2104 = vmatprep.subr.bf16.mxu0 %v1974
    %2105 = vmatpush2.bf16.msra.mxu0 %v1973
    %2106 = vmatprep.subr.bf16.mxu0 %v1972
    %2107 = vmatpush2.bf16.msra.mxu0 %v1971
    %2108 = vmatprep.subr.bf16.mxu0 %v1970
    %2109 = vmatpush2.bf16.msra.mxu0 %v1969
    %2110 = vmatprep.subr.bf16.mxu0 %v1968
    %2111 = vmatpush2.bf16.msra.mxu0 %v1967
    %2112 = vmatprep.subr.bf16.mxu0 %v1966
    %2113 = vmatpush2.bf16.msra.mxu0 %v1965
    %2114 = vmatprep.subr.bf16.mxu0 %v1964
    %2115 = vmatpush2.bf16.msra.mxu0 %v1963
    %2116 = vmatprep.mubr.bf16.mxu0 %v1711
    %2117 = vmatmul.mubr.bf16.gmra.mxu0 %v1710
    %v2118 = vpop.f32.mrf.mxu0
    %v2119 = vadd.f32 %v2078, %v2118
    %v2120 = vpop.f32.mrf.mxu0
    %v2121 = vadd.f32 %v2080, %v2120
    %v2122 = vpop.f32.mrf.mxu0
    %v2123 = vpop.f32.mrf.mxu0
    %2124 = vdwg.mxu0
    %vm2125 = vcmp.gt.f32.partialorder %v2119, 0.0
    %vm2126 = vcmp.gt.f32.partialorder %v2121, 0.0
    %v2127 = vmul.f32 %v2119, 0.2
    %v2128 = vmul.f32 %v2121, 0.2
    %v2129 = vsel %vm2125, %v2119, %v2127
    %v2130 = vsel %vm2126, %v2121, %v2128
    %v2131 = vld [vmem:[#allocation10] sm:$0xf]
    %v2132 = vld [vmem:[#allocation10 + $0x4] sm:$0xf]
    %v2133 = vld [vmem:[#allocation10 + $0x8] sm:$0xf]
    %v2134 = vld [vmem:[#allocation10 + $0xc] sm:$0xf]
    %v2135 = vld [vmem:[#allocation10 + $0x10] sm:$0xf]
    %v2136 = vld [vmem:[#allocation10 + $0x14] sm:$0xf]
    %v2137 = vld [vmem:[#allocation10 + $0x18] sm:$0xf]
    %v2138 = vld [vmem:[#allocation10 + $0x1c] sm:$0xf]
    %v2139 = vld [vmem:[#allocation10 + $0x20] sm:$0xf]
    %v2140 = vld [vmem:[#allocation10 + $0x24] sm:$0xf]
    %v2141 = vld [vmem:[#allocation10 + $0x28] sm:$0xf]
    %v2142 = vld [vmem:[#allocation10 + $0x2c] sm:$0xf]
    %v2143 = vld [vmem:[#allocation10 + $0x30] sm:$0xf]
    %v2144 = vld [vmem:[#allocation10 + $0x34] sm:$0xf]
    %v2145 = vld [vmem:[#allocation10 + $0x38] sm:$0xf]
    %v2146 = vld [vmem:[#allocation10 + $0x3c] sm:$0xf]
    %v2147 = vld [vmem:[#allocation10 + $0x40] sm:$0xf]
    %v2148 = vld [vmem:[#allocation10 + $0x44] sm:$0xf]
    %v2149 = vld [vmem:[#allocation10 + $0x48] sm:$0xf]
    %v2150 = vld [vmem:[#allocation10 + $0x4c] sm:$0xf]
    %v2151 = vld [vmem:[#allocation10 + $0x50] sm:$0xf]
    %v2152 = vld [vmem:[#allocation10 + $0x54] sm:$0xf]
    %v2153 = vld [vmem:[#allocation10 + $0x58] sm:$0xf]
    %v2154 = vld [vmem:[#allocation10 + $0x5c] sm:$0xf]
    %v2155 = vld [vmem:[#allocation10 + $0x60] sm:$0xf]
    %v2156 = vld [vmem:[#allocation10 + $0x64] sm:$0xf]
    %v2157 = vld [vmem:[#allocation10 + $0x68] sm:$0xf]
    %v2158 = vld [vmem:[#allocation10 + $0x6c] sm:$0xf]
    %v2159 = vld [vmem:[#allocation10 + $0x70] sm:$0xf]
    %v2160 = vld [vmem:[#allocation10 + $0x74] sm:$0xf]
    %v2161 = vld [vmem:[#allocation10 + $0x78] sm:$0xf]
    %v2162 = vld [vmem:[#allocation10 + $0x7c] sm:$0xf]
    %v2163 = vld [vmem:[%s6] sm:$0x1]
    %v2164 = vpack.c.bf16 %v2129, %v2129
    %v2165 = vpack.c.bf16 %v2130, %v2130
    %v2167 = vlaneseq
    %v2168 = vshrl.u32 %v2167, 7
    %v2169 = vsub.s32 0, %v2168
    %v2170 = vrot.slane %v2163, %v2169
    %v2204 = vunpack.c.l.b16 %v2131
    %v2205 = vunpack.c.l.b16 %v2132
    %v2206 = vunpack.c.l.b16 %v2133
    %v2207 = vunpack.c.l.b16 %v2134
    %v2208 = vunpack.c.l.b16 %v2135
    %v2209 = vunpack.c.l.b16 %v2136
    %v2210 = vunpack.c.l.b16 %v2137
    %v2211 = vunpack.c.l.b16 %v2138
    %v2212 = vunpack.c.l.b16 %v2139
    %v2213 = vunpack.c.l.b16 %v2140
    %v2214 = vunpack.c.l.b16 %v2141
    %v2215 = vunpack.c.l.b16 %v2142
    %v2216 = vunpack.c.l.b16 %v2143
    %v2217 = vunpack.c.l.b16 %v2144
    %v2218 = vunpack.c.l.b16 %v2145
    %v2219 = vunpack.c.l.b16 %v2146
    %v2220 = vunpack.c.l.b16 %v2147
    %v2221 = vunpack.c.l.b16 %v2148
    %v2222 = vunpack.c.l.b16 %v2149
    %v2223 = vunpack.c.l.b16 %v2150
    %v2224 = vunpack.c.l.b16 %v2151
    %v2225 = vunpack.c.l.b16 %v2152
    %v2226 = vunpack.c.l.b16 %v2153
    %v2227 = vunpack.c.l.b16 %v2154
    %v2228 = vunpack.c.l.b16 %v2155
    %v2229 = vunpack.c.l.b16 %v2156
    %v2230 = vunpack.c.l.b16 %v2157
    %v2231 = vunpack.c.l.b16 %v2158
    %v2232 = vunpack.c.l.b16 %v2159
    %v2233 = vunpack.c.l.b16 %v2160
    %v2234 = vunpack.c.l.b16 %v2161
    %v2235 = vunpack.c.l.b16 %v2162
    %v2236 = vpack.c.b16 %v2205, %v2204
    %v2237 = vpack.c.b16 %v2207, %v2206
    %v2238 = vpack.c.b16 %v2209, %v2208
    %v2239 = vpack.c.b16 %v2211, %v2210
    %v2240 = vpack.c.b16 %v2213, %v2212
    %v2241 = vpack.c.b16 %v2215, %v2214
    %v2242 = vpack.c.b16 %v2217, %v2216
    %v2243 = vpack.c.b16 %v2219, %v2218
    %v2244 = vpack.c.b16 %v2221, %v2220
    %v2245 = vpack.c.b16 %v2223, %v2222
    %v2246 = vpack.c.b16 %v2225, %v2224
    %v2247 = vpack.c.b16 %v2227, %v2226
    %v2248 = vpack.c.b16 %v2229, %v2228
    %v2249 = vpack.c.b16 %v2231, %v2230
    %v2250 = vpack.c.b16 %v2233, %v2232
    %v2251 = vpack.c.b16 %v2235, %v2234
    %2268 = vmatprep.subr.bf16.mxu0 0
    %2269 = vmatpush1.bf16.msra.mxu0 %v2243
    %2270 = vmatprep.subr.bf16.mxu0 0
    %2271 = vmatpush1.bf16.msra.mxu0 %v2242
    %2272 = vmatprep.subr.bf16.mxu0 0
    %2273 = vmatpush1.bf16.msra.mxu0 %v2241
    %2274 = vmatprep.subr.bf16.mxu0 0
    %2275 = vmatpush1.bf16.msra.mxu0 %v2240
    %2276 = vmatprep.subr.bf16.mxu0 0
    %2277 = vmatpush1.bf16.msra.mxu0 %v2239
    %2278 = vmatprep.subr.bf16.mxu0 0
    %2279 = vmatpush1.bf16.msra.mxu0 %v2238
    %2280 = vmatprep.subr.bf16.mxu0 0
    %2281 = vmatpush1.bf16.msra.mxu0 %v2237
    %2282 = vmatprep.subr.bf16.mxu0 0
    %2283 = vmatpush1.bf16.msra.mxu0 %v2236
    %2284 = vmatprep.subr.bf16.mxu0 0
    %2285 = vmatpush2.bf16.msra.mxu0 %v2251
    %2286 = vmatprep.subr.bf16.mxu0 0
    %2287 = vmatpush2.bf16.msra.mxu0 %v2250
    %2288 = vmatprep.subr.bf16.mxu0 0
    %2289 = vmatpush2.bf16.msra.mxu0 %v2249
    %2290 = vmatprep.subr.bf16.mxu0 0
    %2291 = vmatpush2.bf16.msra.mxu0 %v2248
    %2292 = vmatprep.subr.bf16.mxu0 0
    %2293 = vmatpush2.bf16.msra.mxu0 %v2247
    %2294 = vmatprep.subr.bf16.mxu0 0
    %2295 = vmatpush2.bf16.msra.mxu0 %v2246
    %2296 = vmatprep.subr.bf16.mxu0 0
    %2297 = vmatpush2.bf16.msra.mxu0 %v2245
    %2298 = vmatprep.subr.bf16.mxu0 0
    %2299 = vmatpush2.bf16.msra.mxu0 %v2244
    %2300 = vmatprep.mubr.bf16.mxu0 %v2165
    %2301 = vmatmul.mubr.bf16.gmra.mxu0 %v2164
    %v2302 = vpop.f32.mrf.mxu0
    %v2303 = vadd.f32 %v2170, %v2302
    %v2304 = vpop.f32.mrf.mxu0
    %v2305 = vpop.f32.mrf.mxu0
    %v2306 = vpop.f32.mrf.mxu0
    %2307 = vdwg.mxu0
    %vm2308 = vcmp.gt.f32.partialorder %v2303, 0.0
    %v2309 = vmul.f32 %v2303, 0.2
    %v2310 = vsel %vm2308, %v2303, %v2309
    %v2311 = vld [vmem:[#allocation11] sm:$0xf]
    %v2312 = vld [vmem:[#allocation11 + $0x4] sm:$0xf]
    %v2313 = vld [vmem:[#allocation11 + $0x8] sm:$0xf]
    %v2314 = vld [vmem:[#allocation11 + $0xc] sm:$0xf]
    %v2315 = vld [vmem:[#allocation11 + $0x10] sm:$0xf]
    %v2316 = vld [vmem:[#allocation11 + $0x14] sm:$0xf]
    %v2317 = vld [vmem:[#allocation11 + $0x18] sm:$0xf]
    %v2318 = vld [vmem:[#allocation11 + $0x1c] sm:$0xf]
    %v2319 = vld [vmem:[#allocation11 + $0x20] sm:$0xf]
    %v2320 = vld [vmem:[#allocation11 + $0x24] sm:$0xf]
    %v2321 = vld [vmem:[#allocation11 + $0x28] sm:$0xf]
    %v2322 = vld [vmem:[#allocation11 + $0x2c] sm:$0xf]
    %v2323 = vld [vmem:[#allocation11 + $0x30] sm:$0xf]
    %v2324 = vld [vmem:[#allocation11 + $0x34] sm:$0xf]
    %v2325 = vld [vmem:[#allocation11 + $0x38] sm:$0xf]
    %v2326 = vld [vmem:[#allocation11 + $0x3c] sm:$0xf]
    %v2327 = vld [vmem:[%s8] sm:$0x1]
    %v2328 = vpack.c.bf16 %v2310, %v2310
    %v2330 = vlaneseq
    %v2331 = vshrl.u32 %v2330, 7
    %v2332 = vsub.s32 0, %v2331
    %v2333 = vrot.slane %v2327, %v2332
    %v2351 = vunpack.c.l.b16 %v2311
    %v2352 = vunpack.c.l.b16 %v2312
    %v2353 = vunpack.c.l.b16 %v2313
    %v2354 = vunpack.c.l.b16 %v2314
    %v2355 = vunpack.c.l.b16 %v2315
    %v2356 = vunpack.c.l.b16 %v2316
    %v2357 = vunpack.c.l.b16 %v2317
    %v2358 = vunpack.c.l.b16 %v2318
    %v2359 = vunpack.c.l.b16 %v2319
    %v2360 = vunpack.c.l.b16 %v2320
    %v2361 = vunpack.c.l.b16 %v2321
    %v2362 = vunpack.c.l.b16 %v2322
    %v2363 = vunpack.c.l.b16 %v2323
    %v2364 = vunpack.c.l.b16 %v2324
    %v2365 = vunpack.c.l.b16 %v2325
    %v2366 = vunpack.c.l.b16 %v2326
    %v2367 = vpack.c.b16 %v2352, %v2351
    %v2368 = vpack.c.b16 %v2354, %v2353
    %v2369 = vpack.c.b16 %v2356, %v2355
    %v2370 = vpack.c.b16 %v2358, %v2357
    %v2371 = vpack.c.b16 %v2360, %v2359
    %v2372 = vpack.c.b16 %v2362, %v2361
    %v2373 = vpack.c.b16 %v2364, %v2363
    %v2374 = vpack.c.b16 %v2366, %v2365
    %2383 = vmatprep.subr.bf16.mxu0 0
    %2384 = vmatpush1.bf16.msra.mxu0 %v2374
    %2385 = vmatprep.subr.bf16.mxu0 0
    %2386 = vmatpush1.bf16.msra.mxu0 %v2373
    %2387 = vmatprep.subr.bf16.mxu0 0
    %2388 = vmatpush1.bf16.msra.mxu0 %v2372
    %2389 = vmatprep.subr.bf16.mxu0 0
    %2390 = vmatpush1.bf16.msra.mxu0 %v2371
    %2391 = vmatprep.subr.bf16.mxu0 0
    %2392 = vmatpush1.bf16.msra.mxu0 %v2370
    %2393 = vmatprep.subr.bf16.mxu0 0
    %2394 = vmatpush1.bf16.msra.mxu0 %v2369
    %2395 = vmatprep.subr.bf16.mxu0 0
    %2396 = vmatpush1.bf16.msra.mxu0 %v2368
    %2397 = vmatprep.subr.bf16.mxu0 0
    %2398 = vmatpush1.bf16.msra.mxu0 %v2367
    %2399 = vmatprep.subr.bf16.mxu0 0
    %2400 = vmatpush2.bf16.msra.mxu0 0
    %2401 = vmatprep.subr.bf16.mxu0 0
    %2402 = vmatpush2.bf16.msra.mxu0 0
    %2403 = vmatprep.subr.bf16.mxu0 0
    %2404 = vmatpush2.bf16.msra.mxu0 0
    %2405 = vmatprep.subr.bf16.mxu0 0
    %2406 = vmatpush2.bf16.msra.mxu0 0
    %2407 = vmatprep.subr.bf16.mxu0 0
    %2408 = vmatpush2.bf16.msra.mxu0 0
    %2409 = vmatprep.subr.bf16.mxu0 0
    %2410 = vmatpush2.bf16.msra.mxu0 0
    %2411 = vmatprep.subr.bf16.mxu0 0
    %2412 = vmatpush2.bf16.msra.mxu0 0
    %2413 = vmatprep.subr.bf16.mxu0 0
    %2414 = vmatpush2.bf16.msra.mxu0 0
    %2415 = vmatprep.mubr.bf16.mxu0 0
    %2416 = vmatmul.mubr.bf16.gmra.mxu0 %v2328
    %v2417 = vpop.f32.mrf.mxu0
    %v2418 = vadd.f32 %v2333, %v2417
    %v2419 = vpop.f32.mrf.mxu0
    %v2420 = vpop.f32.mrf.mxu0
    %v2421 = vpop.f32.mrf.mxu0
    %2422 = vdwg.mxu0
    %vm2423 = vcmp.gt.f32.partialorder %v2418, 0.0
    %v2424 = vmul.f32 %v2418, 0.2
    %v2425 = vsel %vm2423, %v2418, %v2424
    %v2426 = vld [vmem:[#allocation13] sm:$0xf]
    %v2427 = vld [vmem:[#allocation13 + $0x4] sm:$0xf]
    %v2428 = vld [vmem:[#allocation13 + $0x8] sm:$0xf]
    %v2429 = vld [vmem:[#allocation13 + $0xc] sm:$0xf]
    %v2430 = vld [vmem:[#allocation13 + $0x10] sm:$0xf]
    %v2431 = vld [vmem:[#allocation13 + $0x14] sm:$0xf]
    %v2432 = vld [vmem:[#allocation13 + $0x18] sm:$0xf]
    %v2433 = vld [vmem:[#allocation13 + $0x1c] sm:$0xf]
    %v2434 = vld [vmem:[#allocation13 + $0x20] sm:$0xf]
    %v2435 = vld [vmem:[#allocation13 + $0x24] sm:$0xf]
    %v2436 = vld [vmem:[#allocation13 + $0x28] sm:$0xf]
    %v2437 = vld [vmem:[#allocation13 + $0x2c] sm:$0xf]
    %v2438 = vld [vmem:[#allocation13 + $0x30] sm:$0xf]
    %v2439 = vld [vmem:[#allocation13 + $0x34] sm:$0xf]
    %v2440 = vld [vmem:[#allocation13 + $0x38] sm:$0xf]
    %v2441 = vld [vmem:[#allocation13 + $0x3c] sm:$0xf]
    %v2442 = vld [vmem:[%s10] sm:$0x1]
    %v2443 = vpack.c.bf16 %v2425, %v2425
    %v2445 = vlaneseq
    %v2446 = vshrl.u32 %v2445, 7
    %v2447 = vsub.s32 0, %v2446
    %v2448 = vrot.slane %v2442, %v2447
    %v2466 = vunpack.c.l.b16 %v2426
    %v2467 = vunpack.c.l.b16 %v2427
    %v2468 = vunpack.c.l.b16 %v2428
    %v2469 = vunpack.c.l.b16 %v2429
    %v2470 = vunpack.c.l.b16 %v2430
    %v2471 = vunpack.c.l.b16 %v2431
    %v2472 = vunpack.c.l.b16 %v2432
    %v2473 = vunpack.c.l.b16 %v2433
    %v2474 = vunpack.c.l.b16 %v2434
    %v2475 = vunpack.c.l.b16 %v2435
    %v2476 = vunpack.c.l.b16 %v2436
    %v2477 = vunpack.c.l.b16 %v2437
    %v2478 = vunpack.c.l.b16 %v2438
    %v2479 = vunpack.c.l.b16 %v2439
    %v2480 = vunpack.c.l.b16 %v2440
    %v2481 = vunpack.c.l.b16 %v2441
    %v2482 = vpack.c.b16 %v2467, %v2466
    %v2483 = vpack.c.b16 %v2469, %v2468
    %v2484 = vpack.c.b16 %v2471, %v2470
    %v2485 = vpack.c.b16 %v2473, %v2472
    %v2486 = vpack.c.b16 %v2475, %v2474
    %v2487 = vpack.c.b16 %v2477, %v2476
    %v2488 = vpack.c.b16 %v2479, %v2478
    %v2489 = vpack.c.b16 %v2481, %v2480
    %2498 = vmatprep.subr.bf16.mxu0 0
    %2499 = vmatpush1.bf16.msra.mxu0 %v2489
    %2500 = vmatprep.subr.bf16.mxu0 0
    %2501 = vmatpush1.bf16.msra.mxu0 %v2488
    %2502 = vmatprep.subr.bf16.mxu0 0
    %2503 = vmatpush1.bf16.msra.mxu0 %v2487
    %2504 = vmatprep.subr.bf16.mxu0 0
    %2505 = vmatpush1.bf16.msra.mxu0 %v2486
    %2506 = vmatprep.subr.bf16.mxu0 0
    %2507 = vmatpush1.bf16.msra.mxu0 %v2485
    %2508 = vmatprep.subr.bf16.mxu0 0
    %2509 = vmatpush1.bf16.msra.mxu0 %v2484
    %2510 = vmatprep.subr.bf16.mxu0 0
    %2511 = vmatpush1.bf16.msra.mxu0 %v2483
    %2512 = vmatprep.subr.bf16.mxu0 0
    %2513 = vmatpush1.bf16.msra.mxu0 %v2482
    %2514 = vmatprep.subr.bf16.mxu0 0
    %2515 = vmatpush2.bf16.msra.mxu0 0
    %2516 = vmatprep.subr.bf16.mxu0 0
    %2517 = vmatpush2.bf16.msra.mxu0 0
    %2518 = vmatprep.subr.bf16.mxu0 0
    %2519 = vmatpush2.bf16.msra.mxu0 0
    %2520 = vmatprep.subr.bf16.mxu0 0
    %2521 = vmatpush2.bf16.msra.mxu0 0
    %2522 = vmatprep.subr.bf16.mxu0 0
    %2523 = vmatpush2.bf16.msra.mxu0 0
    %2524 = vmatprep.subr.bf16.mxu0 0
    %2525 = vmatpush2.bf16.msra.mxu0 0
    %2526 = vmatprep.subr.bf16.mxu0 0
    %2527 = vmatpush2.bf16.msra.mxu0 0
    %2528 = vmatprep.subr.bf16.mxu0 0
    %2529 = vmatpush2.bf16.msra.mxu0 0
    %2530 = vmatprep.mubr.bf16.mxu0 0
    %2531 = vmatmul.mubr.bf16.gmra.mxu0 %v2443
    %v2532 = vpop.f32.mrf.mxu0
    %v2533 = vadd.f32 %v2448, %v2532
    %v2534 = vpop.f32.mrf.mxu0
    %v2535 = vpop.f32.mrf.mxu0
    %v2536 = vpop.f32.mrf.mxu0
    %2537 = vdwg.mxu0
    %vm2538 = vcmp.gt.f32.partialorder %v2533, 0.0
    %v2539 = vmul.f32 %v2533, 0.2
    %v2540 = vsel %vm2538, %v2533, %v2539
    %v2541 = vld [vmem:[#allocation14] sm:$0xff]
    %v2542 = vld [vmem:[#allocation14 + $0x8] sm:$0xff]
    %v2543 = vld [vmem:[#allocation14 + $0x10] sm:$0xff]
    %v2544 = vld [vmem:[#allocation14 + $0x18] sm:$0xff]
    %v2545 = vld [vmem:[#allocation14 + $0x20] sm:$0xff]
    %v2546 = vld [vmem:[#allocation14 + $0x28] sm:$0xff]
    %v2547 = vld [vmem:[#allocation14 + $0x30] sm:$0xff]
    %v2548 = vld [vmem:[#allocation14 + $0x38] sm:$0xff]
    %v2549 = vld [vmem:[#allocation14 + $0x40] sm:$0xff]
    %v2550 = vld [vmem:[#allocation14 + $0x48] sm:$0xff]
    %v2551 = vld [vmem:[#allocation14 + $0x50] sm:$0xff]
    %v2552 = vld [vmem:[#allocation14 + $0x58] sm:$0xff]
    %v2553 = vld [vmem:[#allocation14 + $0x60] sm:$0xff]
    %v2554 = vld [vmem:[#allocation14 + $0x68] sm:$0xff]
    %v2555 = vld [vmem:[#allocation14 + $0x70] sm:$0xff]
    %v2556 = vld [vmem:[#allocation14 + $0x78] sm:$0xff]
    %v2557 = vld [vmem:[%s12] sm:$0x3]
    %v2558 = vpack.c.bf16 %v2540, %v2540
    %v2560 = vlaneseq
    %v2561 = vshrl.u32 %v2560, 7
    %v2562 = vsub.s32 0, %v2561
    %v2563 = vrot.slane %v2557, %v2562
    %v2564 = vlaneseq
    %v2565 = vshrl.u32 %v2564, 7
    %v2566 = vsub.s32 1, %v2565
    %v2567 = vrot.slane %v2557, %v2566
    %v2586 = vunpack.c.l.b16 %v2541
    %v2587 = vunpack.c.h.b16 %v2541
    %v2588 = vunpack.c.l.b16 %v2542
    %v2589 = vunpack.c.h.b16 %v2542
    %v2590 = vunpack.c.l.b16 %v2543
    %v2591 = vunpack.c.h.b16 %v2543
    %v2592 = vunpack.c.l.b16 %v2544
    %v2593 = vunpack.c.h.b16 %v2544
    %v2594 = vunpack.c.l.b16 %v2545
    %v2595 = vunpack.c.h.b16 %v2545
    %v2596 = vunpack.c.l.b16 %v2546
    %v2597 = vunpack.c.h.b16 %v2546
    %v2598 = vunpack.c.l.b16 %v2547
    %v2599 = vunpack.c.h.b16 %v2547
    %v2600 = vunpack.c.l.b16 %v2548
    %v2601 = vunpack.c.h.b16 %v2548
    %v2602 = vunpack.c.l.b16 %v2549
    %v2603 = vunpack.c.h.b16 %v2549
    %v2604 = vunpack.c.l.b16 %v2550
    %v2605 = vunpack.c.h.b16 %v2550
    %v2606 = vunpack.c.l.b16 %v2551
    %v2607 = vunpack.c.h.b16 %v2551
    %v2608 = vunpack.c.l.b16 %v2552
    %v2609 = vunpack.c.h.b16 %v2552
    %v2610 = vunpack.c.l.b16 %v2553
    %v2611 = vunpack.c.h.b16 %v2553
    %v2612 = vunpack.c.l.b16 %v2554
    %v2613 = vunpack.c.h.b16 %v2554
    %v2614 = vunpack.c.l.b16 %v2555
    %v2615 = vunpack.c.h.b16 %v2555
    %v2616 = vunpack.c.l.b16 %v2556
    %v2617 = vunpack.c.h.b16 %v2556
    %v2618 = vpack.c.b16 %v2588, %v2586
    %v2619 = vpack.c.b16 %v2589, %v2587
    %v2620 = vpack.c.b16 %v2592, %v2590
    %v2621 = vpack.c.b16 %v2593, %v2591
    %v2622 = vpack.c.b16 %v2596, %v2594
    %v2623 = vpack.c.b16 %v2597, %v2595
    %v2624 = vpack.c.b16 %v2600, %v2598
    %v2625 = vpack.c.b16 %v2601, %v2599
    %v2626 = vpack.c.b16 %v2604, %v2602
    %v2627 = vpack.c.b16 %v2605, %v2603
    %v2628 = vpack.c.b16 %v2608, %v2606
    %v2629 = vpack.c.b16 %v2609, %v2607
    %v2630 = vpack.c.b16 %v2612, %v2610
    %v2631 = vpack.c.b16 %v2613, %v2611
    %v2632 = vpack.c.b16 %v2616, %v2614
    %v2633 = vpack.c.b16 %v2617, %v2615
    %2650 = vmatprep.subr.bf16.mxu0 %v2633
    %2651 = vmatpush1.bf16.msra.mxu0 %v2632
    %2652 = vmatprep.subr.bf16.mxu0 %v2631
    %2653 = vmatpush1.bf16.msra.mxu0 %v2630
    %2654 = vmatprep.subr.bf16.mxu0 %v2629
    %2655 = vmatpush1.bf16.msra.mxu0 %v2628
    %2656 = vmatprep.subr.bf16.mxu0 %v2627
    %2657 = vmatpush1.bf16.msra.mxu0 %v2626
    %2658 = vmatprep.subr.bf16.mxu0 %v2625
    %2659 = vmatpush1.bf16.msra.mxu0 %v2624
    %2660 = vmatprep.subr.bf16.mxu0 %v2623
    %2661 = vmatpush1.bf16.msra.mxu0 %v2622
    %2662 = vmatprep.subr.bf16.mxu0 %v2621
    %2663 = vmatpush1.bf16.msra.mxu0 %v2620
    %2664 = vmatprep.subr.bf16.mxu0 %v2619
    %2665 = vmatpush1.bf16.msra.mxu0 %v2618
    %2666 = vmatprep.subr.bf16.mxu0 0
    %2667 = vmatpush2.bf16.msra.mxu0 0
    %2668 = vmatprep.subr.bf16.mxu0 0
    %2669 = vmatpush2.bf16.msra.mxu0 0
    %2670 = vmatprep.subr.bf16.mxu0 0
    %2671 = vmatpush2.bf16.msra.mxu0 0
    %2672 = vmatprep.subr.bf16.mxu0 0
    %2673 = vmatpush2.bf16.msra.mxu0 0
    %2674 = vmatprep.subr.bf16.mxu0 0
    %2675 = vmatpush2.bf16.msra.mxu0 0
    %2676 = vmatprep.subr.bf16.mxu0 0
    %2677 = vmatpush2.bf16.msra.mxu0 0
    %2678 = vmatprep.subr.bf16.mxu0 0
    %2679 = vmatpush2.bf16.msra.mxu0 0
    %2680 = vmatprep.subr.bf16.mxu0 0
    %2681 = vmatpush2.bf16.msra.mxu0 0
    %2682 = vmatprep.mubr.bf16.mxu0 0
    %2683 = vmatmul.mubr.bf16.gmra.mxu0 %v2558
    %v2684 = vpop.f32.mrf.mxu0
    %v2685 = vadd.f32 %v2563, %v2684
    %v2686 = vpop.f32.mrf.mxu0
    %v2687 = vadd.f32 %v2567, %v2686
    %v2688 = vpop.f32.mrf.mxu0
    %v2689 = vpop.f32.mrf.mxu0
    %2690 = vdwg.mxu0
    %vm2691 = vcmp.gt.f32.partialorder %v2685, 0.0
    %vm2692 = vcmp.gt.f32.partialorder %v2687, 0.0
    %v2693 = vmul.f32 %v2685, 0.2
    %v2694 = vmul.f32 %v2687, 0.2
    %v2695 = vsel %vm2691, %v2685, %v2693
    %v2696 = vsel %vm2692, %v2687, %v2694
    %v2697 = vld [vmem:[#allocation16] sm:$0xf]
    %v2698 = vld [vmem:[#allocation16 + $0x4] sm:$0xf]
    %v2699 = vld [vmem:[#allocation16 + $0x8] sm:$0xf]
    %v2700 = vld [vmem:[#allocation16 + $0xc] sm:$0xf]
    %v2701 = vld [vmem:[#allocation16 + $0x10] sm:$0xf]
    %v2702 = vld [vmem:[#allocation16 + $0x14] sm:$0xf]
    %v2703 = vld [vmem:[#allocation16 + $0x18] sm:$0xf]
    %v2704 = vld [vmem:[#allocation16 + $0x1c] sm:$0xf]
    %v2705 = vld [vmem:[#allocation16 + $0x20] sm:$0xf]
    %v2706 = vld [vmem:[#allocation16 + $0x24] sm:$0xf]
    %v2707 = vld [vmem:[#allocation16 + $0x28] sm:$0xf]
    %v2708 = vld [vmem:[#allocation16 + $0x2c] sm:$0xf]
    %v2709 = vld [vmem:[#allocation16 + $0x30] sm:$0xf]
    %v2710 = vld [vmem:[#allocation16 + $0x34] sm:$0xf]
    %v2711 = vld [vmem:[#allocation16 + $0x38] sm:$0xf]
    %v2712 = vld [vmem:[#allocation16 + $0x3c] sm:$0xf]
    %v2713 = vld [vmem:[#allocation16 + $0x40] sm:$0xf]
    %v2714 = vld [vmem:[#allocation16 + $0x44] sm:$0xf]
    %v2715 = vld [vmem:[#allocation16 + $0x48] sm:$0xf]
    %v2716 = vld [vmem:[#allocation16 + $0x4c] sm:$0xf]
    %v2717 = vld [vmem:[#allocation16 + $0x50] sm:$0xf]
    %v2718 = vld [vmem:[#allocation16 + $0x54] sm:$0xf]
    %v2719 = vld [vmem:[#allocation16 + $0x58] sm:$0xf]
    %v2720 = vld [vmem:[#allocation16 + $0x5c] sm:$0xf]
    %v2721 = vld [vmem:[#allocation16 + $0x60] sm:$0xf]
    %v2722 = vld [vmem:[#allocation16 + $0x64] sm:$0xf]
    %v2723 = vld [vmem:[#allocation16 + $0x68] sm:$0xf]
    %v2724 = vld [vmem:[#allocation16 + $0x6c] sm:$0xf]
    %v2725 = vld [vmem:[#allocation16 + $0x70] sm:$0xf]
    %v2726 = vld [vmem:[#allocation16 + $0x74] sm:$0xf]
    %v2727 = vld [vmem:[#allocation16 + $0x78] sm:$0xf]
    %v2728 = vld [vmem:[#allocation16 + $0x7c] sm:$0xf]
    %v2729 = vld [vmem:[%s14] sm:$0x1]
    %v2730 = vpack.c.bf16 %v2695, %v2695
    %v2731 = vpack.c.bf16 %v2696, %v2696
    %v2733 = vlaneseq
    %v2734 = vshrl.u32 %v2733, 7
    %v2735 = vsub.s32 0, %v2734
    %v2736 = vrot.slane %v2729, %v2735
    %v2770 = vunpack.c.l.b16 %v2697
    %v2771 = vunpack.c.l.b16 %v2698
    %v2772 = vunpack.c.l.b16 %v2699
    %v2773 = vunpack.c.l.b16 %v2700
    %v2774 = vunpack.c.l.b16 %v2701
    %v2775 = vunpack.c.l.b16 %v2702
    %v2776 = vunpack.c.l.b16 %v2703
    %v2777 = vunpack.c.l.b16 %v2704
    %v2778 = vunpack.c.l.b16 %v2705
    %v2779 = vunpack.c.l.b16 %v2706
    %v2780 = vunpack.c.l.b16 %v2707
    %v2781 = vunpack.c.l.b16 %v2708
    %v2782 = vunpack.c.l.b16 %v2709
    %v2783 = vunpack.c.l.b16 %v2710
    %v2784 = vunpack.c.l.b16 %v2711
    %v2785 = vunpack.c.l.b16 %v2712
    %v2786 = vunpack.c.l.b16 %v2713
    %v2787 = vunpack.c.l.b16 %v2714
    %v2788 = vunpack.c.l.b16 %v2715
    %v2789 = vunpack.c.l.b16 %v2716
    %v2790 = vunpack.c.l.b16 %v2717
    %v2791 = vunpack.c.l.b16 %v2718
    %v2792 = vunpack.c.l.b16 %v2719
    %v2793 = vunpack.c.l.b16 %v2720
    %v2794 = vunpack.c.l.b16 %v2721
    %v2795 = vunpack.c.l.b16 %v2722
    %v2796 = vunpack.c.l.b16 %v2723
    %v2797 = vunpack.c.l.b16 %v2724
    %v2798 = vunpack.c.l.b16 %v2725
    %v2799 = vunpack.c.l.b16 %v2726
    %v2800 = vunpack.c.l.b16 %v2727
    %v2801 = vunpack.c.l.b16 %v2728
    %v2802 = vpack.c.b16 %v2771, %v2770
    %v2803 = vpack.c.b16 %v2773, %v2772
    %v2804 = vpack.c.b16 %v2775, %v2774
    %v2805 = vpack.c.b16 %v2777, %v2776
    %v2806 = vpack.c.b16 %v2779, %v2778
    %v2807 = vpack.c.b16 %v2781, %v2780
    %v2808 = vpack.c.b16 %v2783, %v2782
    %v2809 = vpack.c.b16 %v2785, %v2784
    %v2810 = vpack.c.b16 %v2787, %v2786
    %v2811 = vpack.c.b16 %v2789, %v2788
    %v2812 = vpack.c.b16 %v2791, %v2790
    %v2813 = vpack.c.b16 %v2793, %v2792
    %v2814 = vpack.c.b16 %v2795, %v2794
    %v2815 = vpack.c.b16 %v2797, %v2796
    %v2816 = vpack.c.b16 %v2799, %v2798
    %v2817 = vpack.c.b16 %v2801, %v2800
    %2834 = vmatprep.subr.bf16.mxu0 0
    %2835 = vmatpush1.bf16.msra.mxu0 %v2809
    %2836 = vmatprep.subr.bf16.mxu0 0
    %2837 = vmatpush1.bf16.msra.mxu0 %v2808
    %2838 = vmatprep.subr.bf16.mxu0 0
    %2839 = vmatpush1.bf16.msra.mxu0 %v2807
    %2840 = vmatprep.subr.bf16.mxu0 0
    %2841 = vmatpush1.bf16.msra.mxu0 %v2806
    %2842 = vmatprep.subr.bf16.mxu0 0
    %2843 = vmatpush1.bf16.msra.mxu0 %v2805
    %2844 = vmatprep.subr.bf16.mxu0 0
    %2845 = vmatpush1.bf16.msra.mxu0 %v2804
    %2846 = vmatprep.subr.bf16.mxu0 0
    %2847 = vmatpush1.bf16.msra.mxu0 %v2803
    %2848 = vmatprep.subr.bf16.mxu0 0
    %2849 = vmatpush1.bf16.msra.mxu0 %v2802
    %2850 = vmatprep.subr.bf16.mxu0 0
    %2851 = vmatpush2.bf16.msra.mxu0 %v2817
    %2852 = vmatprep.subr.bf16.mxu0 0
    %2853 = vmatpush2.bf16.msra.mxu0 %v2816
    %2854 = vmatprep.subr.bf16.mxu0 0
    %2855 = vmatpush2.bf16.msra.mxu0 %v2815
    %2856 = vmatprep.subr.bf16.mxu0 0
    %2857 = vmatpush2.bf16.msra.mxu0 %v2814
    %2858 = vmatprep.subr.bf16.mxu0 0
    %2859 = vmatpush2.bf16.msra.mxu0 %v2813
    %2860 = vmatprep.subr.bf16.mxu0 0
    %2861 = vmatpush2.bf16.msra.mxu0 %v2812
    %2862 = vmatprep.subr.bf16.mxu0 0
    %2863 = vmatpush2.bf16.msra.mxu0 %v2811
    %2864 = vmatprep.subr.bf16.mxu0 0
    %2865 = vmatpush2.bf16.msra.mxu0 %v2810
    %2866 = vmatprep.mubr.bf16.mxu0 %v2731
    %2867 = vmatmul.mubr.bf16.gmra.mxu0 %v2730
    %v2868 = vpop.f32.mrf.mxu0
    %v2869 = vadd.f32 %v2736, %v2868
    %v2870 = vpop.f32.mrf.mxu0
    %v2871 = vpop.f32.mrf.mxu0
    %v2872 = vpop.f32.mrf.mxu0
    %2873 = vdwg.mxu0
    %2874 = vst [vmem:[#allocation17] sm:$0x3] %v2869
    // Predicated region
    $region98: #{tpu_custom_call.1} parent=1 // pred_check
      _
    $region99: #{tpu_custom_call.1} parent=1 // pred_check_branch
      %2876 = sbr.rel (0) target = $region101
    $region100: #{tpu_custom_call.1} parent=1 // pred_region
      %s2878 = ssub.s32 32, 32
      %2879 = vsyncadd [#allocation4], %s2878
      %s2881 = sshll.u32 [#allocation17], 4
      %s2882 = int_to_ptr.vmem [resolvable:$true] %s2881
      %2884 = dma.vmem_to_hbm [thread:$0]  %s2882, 32, %s15, [#allocation4]
    $region101: #{tpu_custom_call.1} parent=1 // pred_fallthru
      _
    // Predicated region
    $region102: #{tpu_custom_call.1} parent=1 // pred_check
      _
    $region103: #{tpu_custom_call.1} parent=1 // pred_check_branch
      %2886 = sbr.rel (0) target = $region105
    $region104: #{tpu_custom_call.1} parent=1 // pred_region
      %2887 = dma.done [#allocation4], 32
    $region105: #{tpu_custom_call.1} parent=1 // pred_fallthru
      _
    %2888 = vsyncpa [#allocation3], 1
    %2889 = vsyncpa [#allocation6], 1
    %2890 = vsyncpa [#allocation9], 1
    %2891 = vsyncpa [#allocation12], 1
    %2892 = vsyncpa [#allocation15], 1
    %2893 = vsyncpa [#allocation4], 1

</llo_original>
